<compile_context>
chip_gen: v5e
topology: v5e:2x2
jax: 0.10.0
libtpu: 0.0.40
codegen_flags: <defaults>
</compile_context>

<pallas_src>
import jax
import jax.numpy as jnp
from jax import lax
from jax.experimental import pallas as pl
from jax.experimental.pallas import tpu as pltpu


def lstm_kernel(pre0_ref, wcat_ref, whh1_ref, b1_ref, h_out_ref):
    """pre0: (T, B, 4H) precomputed layer-0 input projection (b0 folded in).
       wcat: (H, 8H) = [W_hh0 | W_ih1].  whh1: (H, 4H).  b1: (1, 4H)."""
    T, B, G = pre0_ref.shape
    H = whh1_ref.shape[0]
    G4 = 4 * H

    # Hoist all weights / bias out of the recurrence (few vregs at H=32).
    wcat = wcat_ref[...]                                   # (H, 8H)
    whh1 = whh1_ref[...]                                   # (H, 4H)
    b1 = jnp.broadcast_to(b1_ref[...], (B, G4))            # hoisted broadcast

    def gates(z, c):
        # Full 128-lane-width activations (2 EUP passes), then static slices.
        s = jax.nn.sigmoid(z)
        th = jnp.tanh(z)
        i = s[:, 0 * H:1 * H]
        f = s[:, 1 * H:2 * H]
        g = th[:, 2 * H:3 * H]
        o = s[:, 3 * H:4 * H]
        c_new = f * c + i * g
        h_new = o * jnp.tanh(c_new)
        return h_new, c_new

    def step(t, carry):
        r0, c0, h1, c1 = carry                             # r0 = h0_prev @ W_hh0
        # ----- layer 0: no matmul on the critical path (pre0 precomputed) -----
        z0 = pre0_ref[t] + r0                              # (B, 4H)
        h0, c0 = gates(z0, c0)
        # ----- fused: one MXU push produces next-step r0 AND layer-1 ih term --
        cat = jnp.dot(h0, wcat, preferred_element_type=jnp.float32)   # (B, 8H)
        r0_next = cat[:, :G4]
        # h1 @ W_hh1 is off the critical path (depends only on previous h1).
        z1 = (cat[:, G4:]
              + jnp.dot(h1, whh1, preferred_element_type=jnp.float32)
              + b1)
        # TODO(synk): inter-layer Dropout(p=0.2) is identity in eval mode.
        h1, c1 = gates(z1, c1)
        return r0_next, c0, h1, c1

    zH = jnp.zeros((B, H), jnp.float32)
    z4H = jnp.zeros((B, G4), jnp.float32)
    # T is small and static -> fully unroll so the serial recurrence is visible
    # to the LLO scheduler and per-step work can interleave.
    _, _, h1, _ = lax.fori_loop(0, T, step, (z4H, zH, zH, zH), unroll=True)

    h_out_ref[...] = h1


def lstm_model_forward(x_btI, params):
    """x_btI: (B, T, I) float32, batch-first like the PyTorch module."""
    B, T, I = x_btI.shape
    H = params["whh1"].shape[0]

    x = x_btI.astype(jnp.float32)

    # (1) Precompute layer-0 input projection for ALL timesteps in one matmul,
    #     with b0 folded in; reorder to time-major (T, B, 4H).
    pre0 = (x.reshape(B * T, I) @ params["wih0"] + params["b0"]).reshape(B, T, 4 * H)
    pre0 = jnp.transpose(pre0, (1, 0, 2))                  # (T, B, 4H)

    # Pad batch to a multiple of 8 (f32 sublane). Padded rows run a valid LSTM
    # on zero pre-activations and are sliced off afterwards.
    Bp = ((B + 7) // 8) * 8
    if Bp != B:
        pre0 = jnp.pad(pre0, ((0, 0), (0, Bp - B), (0, 0)))

    # (2) Fuse the two matmuls that share h0_new as LHS: [W_hh0 | W_ih1] -> (H, 8H).
    wcat = jnp.concatenate([params["whh0"], params["wih1"]], axis=1)

    vmem = pl.BlockSpec(memory_space=pltpu.MemorySpace.VMEM)
    args = (pre0, wcat, params["whh1"], params["b1"])

    h_last = pl.pallas_call(
        lstm_kernel,
        out_shape=jax.ShapeDtypeStruct((Bp, H), jnp.float32),
        in_specs=[vmem] * len(args),
        out_specs=vmem,
    )(*args)

    # fc(out[:, -1, :]) == fc(last hidden of top layer): tiny GEMV, free in XLA.
    return h_last[:B] @ params["wfc"] + params["bfc"]


def init_params(key, input_size, hidden_size, output_size):
    """PyTorch-style uniform(-1/sqrt(H), 1/sqrt(H)) init, fused-gate layout.
    Gate order along the 4H axis is PyTorch's [i, f, g, o]."""
    H, I, O = hidden_size, input_size, output_size
    k = 1.0 / jnp.sqrt(jnp.float32(H))
    keys = jax.random.split(key, 12)

    def u(kk, shape):
        return jax.random.uniform(kk, shape, jnp.float32, -k, k)

    def fuse_w(w4):      # (4, H, in) per-gate rows -> (in, 4H)
        return jnp.transpose(w4, (2, 0, 1)).reshape(w4.shape[2], 4 * w4.shape[1])

    def fuse_b(b_ih, b_hh):   # (4, H) each -> (1, 4H)
        return (b_ih + b_hh).reshape(1, -1)

    # layer 0: input size I
    wih0 = fuse_w(u(keys[0], (4, H, I)))
    whh0 = fuse_w(u(keys[1], (4, H, H)))
    b0 = fuse_b(u(keys[2], (4, H)), u(keys[3], (4, H)))
    # layer 1: input is h of layer 0 (size H)
    wih1 = fuse_w(u(keys[4], (4, H, H)))
    whh1 = fuse_w(u(keys[5], (4, H, H)))
    b1 = fuse_b(u(keys[6], (4, H)), u(keys[7], (4, H)))
    # fc: (H, O)
    wfc = jax.random.uniform(keys[8], (H, O), jnp.float32, -k, k)
    bfc = jax.random.uniform(keys[9], (1, O), jnp.float32, -k, k)
    # TODO(synk): loading real torch checkpoints requires transposing
    # weight_ih/weight_hh from (4H, in) to (in, 4H) keeping [i,f,g,o] order.
    return dict(wih0=wih0, whh0=whh0, b0=b0,
                wih1=wih1, whh1=whh1, b1=b1,
                wfc=wfc, bfc=bfc)


def reference_forward(x_btI, params):
    """Pure-JAX reference of the same LSTM->Linear forward (fused layout)."""
    B, T, _ = x_btI.shape
    H = params["whh1"].shape[0]

    def cell(x_t, h, c, wih, whh, b):
        z = x_t @ wih + h @ whh + b
        i = jax.nn.sigmoid(z[:, 0 * H:1 * H])
        f = jax.nn.sigmoid(z[:, 1 * H:2 * H])
        g = jnp.tanh(z[:, 2 * H:3 * H])
        o = jax.nn.sigmoid(z[:, 3 * H:4 * H])
        c = f * c + i * g
        return o * jnp.tanh(c), c

    h0 = c0 = h1 = c1 = jnp.zeros((B, H), jnp.float32)
    for t in range(T):
        x_t = x_btI[:, t, :]
        h0, c0 = cell(x_t, h0, c0, params["wih0"], params["whh0"], params["b0"])
        h1, c1 = cell(h0, h1, c1, params["wih1"], params["whh1"], params["b1"])
    return h1 @ params["wfc"] + params["bfc"]


if __name__ == "__main__":
    # Small shapes consistent with the module: (batch, seq, input_size); H=32
    # so the fused gate width 4H = 128 is exactly one lane-full tile.
    batch, seq, input_size, hidden_size, output_size = 4, 8, 6, 32, 1

    key = jax.random.PRNGKey(0)
    kx, kp = jax.random.split(key)
    x = jax.random.normal(kx, (batch, seq, input_size), jnp.float32)
    params = init_params(kp, input_size, hidden_size, output_size)

    out = lstm_model_forward(x, params)
    out = jax.block_until_ready(out)

    ref = reference_forward(x, params)
    assert out.shape == (batch, output_size)
    assert jnp.allclose(out, ref, rtol=1e-4, atol=1e-4)

    print("KERNEL_OK")
</pallas_src>

<mosaic_0001>
module attributes {stable_mosaic.version = 11 : i64} {
  func.func @lstm_kernel(%arg0: memref<8x8x128xf32, #tpu.memory_space<vmem>>, %arg1: memref<32x256xf32, #tpu.memory_space<vmem>>, %arg2: memref<32x128xf32, #tpu.memory_space<vmem>>, %arg3: memref<1x128xf32, #tpu.memory_space<vmem>>, %arg4: memref<8x32xf32, #tpu.memory_space<vmem>>) attributes {dimension_semantics = [], scalar_prefetch = 0 : i64, scratch_operands = 0 : i64, tpu.core_type = #tpu.core_type<tc>} {
    %c0 = arith.constant 0 : index
    %c0_0 = arith.constant 0 : index
    %0 = vector.load %arg1[%c0, %c0_0] : memref<32x256xf32, #tpu.memory_space<vmem>>, vector<32x256xf32>
    %c0_1 = arith.constant 0 : index
    %c0_2 = arith.constant 0 : index
    %1 = vector.load %arg2[%c0_1, %c0_2] : memref<32x128xf32, #tpu.memory_space<vmem>>, vector<32x128xf32>
    %c0_3 = arith.constant 0 : index
    %c0_4 = arith.constant 0 : index
    %2 = vector.load %arg3[%c0_3, %c0_4] : memref<1x128xf32, #tpu.memory_space<vmem>>, vector<1x128xf32>
    %3 = vector.shape_cast %2 : vector<1x128xf32> to vector<1x128xf32>
    %4 = vector.broadcast %3 : vector<1x128xf32> to vector<8x128xf32>
    %cst = arith.constant 0.000000e+00 : f32
    %5 = vector.broadcast %cst : f32 to vector<8x32xf32>
    %cst_5 = arith.constant 0.000000e+00 : f32
    %6 = vector.broadcast %cst_5 : f32 to vector<8x128xf32>
    %c0_i32 = arith.constant 0 : i32
    %7 = arith.index_cast %c0_i32 : i32 to index
    %c0_6 = arith.constant 0 : index
    %c0_7 = arith.constant 0 : index
    %8 = vector.load %arg0[%7, %c0_6, %c0_7] : memref<8x8x128xf32, #tpu.memory_space<vmem>>, vector<1x8x128xf32>
    %9 = vector.shape_cast %8 : vector<1x8x128xf32> to vector<8x128xf32>
    %10 = arith.addf %9, %6 : vector<8x128xf32>
    %11 = arith.negf %10 : vector<8x128xf32>
    %12 = math.exp %11 : vector<8x128xf32>
    %cst_8 = arith.constant 1.000000e+00 : f32
    %13 = vector.broadcast %cst_8 : f32 to vector<8x128xf32>
    %14 = arith.addf %13, %12 : vector<8x128xf32>
    %15 = arith.divf %13, %14 : vector<8x128xf32>
    %16 = math.tanh %10 : vector<8x128xf32>
    %17 = vector.extract_strided_slice %15 {offsets = [0, 0], sizes = [8, 32], strides = [1, 1]} : vector<8x128xf32> to vector<8x32xf32>
    %18 = vector.extract_strided_slice %15 {offsets = [0, 32], sizes = [8, 32], strides = [1, 1]} : vector<8x128xf32> to vector<8x32xf32>
    %19 = vector.extract_strided_slice %16 {offsets = [0, 64], sizes = [8, 32], strides = [1, 1]} : vector<8x128xf32> to vector<8x32xf32>
    %20 = vector.extract_strided_slice %15 {offsets = [0, 96], sizes = [8, 32], strides = [1, 1]} : vector<8x128xf32> to vector<8x32xf32>
    %21 = arith.mulf %18, %5 : vector<8x32xf32>
    %22 = arith.mulf %17, %19 : vector<8x32xf32>
    %23 = arith.addf %21, %22 : vector<8x32xf32>
    %24 = math.tanh %23 : vector<8x32xf32>
    %25 = arith.mulf %20, %24 : vector<8x32xf32>
    %cst_9 = arith.constant dense<0.000000e+00> : vector<8x256xf32>
    %26 = tpu.matmul %25, %0, %cst_9 {dimension_numbers = #tpu.dot_dimension_numbers<[1], [0], [0], [1], [0, 0, 1, 1], [], []>} : vector<8x32xf32>, vector<32x256xf32>, vector<8x256xf32> -> vector<8x256xf32>
    %27 = vector.extract_strided_slice %26 {offsets = [0, 0], sizes = [8, 128], strides = [1, 1]} : vector<8x256xf32> to vector<8x128xf32>
    %28 = vector.extract_strided_slice %26 {offsets = [0, 128], sizes = [8, 128], strides = [1, 1]} : vector<8x256xf32> to vector<8x128xf32>
    %cst_10 = arith.constant dense<0.000000e+00> : vector<8x128xf32>
    %29 = tpu.matmul %5, %1, %cst_10 {dimension_numbers = #tpu.dot_dimension_numbers<[1], [0], [0], [1], [0, 0, 1, 1], [], []>} : vector<8x32xf32>, vector<32x128xf32>, vector<8x128xf32> -> vector<8x128xf32>
    %30 = arith.addf %28, %29 : vector<8x128xf32>
    %31 = arith.addf %30, %4 : vector<8x128xf32>
    %32 = arith.negf %31 : vector<8x128xf32>
    %33 = math.exp %32 : vector<8x128xf32>
    %cst_11 = arith.constant 1.000000e+00 : f32
    %34 = vector.broadcast %cst_11 : f32 to vector<8x128xf32>
    %35 = arith.addf %34, %33 : vector<8x128xf32>
    %36 = arith.divf %34, %35 : vector<8x128xf32>
    %37 = math.tanh %31 : vector<8x128xf32>
    %38 = vector.extract_strided_slice %36 {offsets = [0, 0], sizes = [8, 32], strides = [1, 1]} : vector<8x128xf32> to vector<8x32xf32>
    %39 = vector.extract_strided_slice %36 {offsets = [0, 32], sizes = [8, 32], strides = [1, 1]} : vector<8x128xf32> to vector<8x32xf32>
    %40 = vector.extract_strided_slice %37 {offsets = [0, 64], sizes = [8, 32], strides = [1, 1]} : vector<8x128xf32> to vector<8x32xf32>
    %41 = vector.extract_strided_slice %36 {offsets = [0, 96], sizes = [8, 32], strides = [1, 1]} : vector<8x128xf32> to vector<8x32xf32>
    %42 = arith.mulf %39, %5 : vector<8x32xf32>
    %43 = arith.mulf %38, %40 : vector<8x32xf32>
    %44 = arith.addf %42, %43 : vector<8x32xf32>
    %45 = math.tanh %44 : vector<8x32xf32>
    %46 = arith.mulf %41, %45 : vector<8x32xf32>
    %c1_i32 = arith.constant 1 : i32
    %47 = arith.index_cast %c1_i32 : i32 to index
    %c0_12 = arith.constant 0 : index
    %c0_13 = arith.constant 0 : index
    %48 = vector.load %arg0[%47, %c0_12, %c0_13] : memref<8x8x128xf32, #tpu.memory_space<vmem>>, vector<1x8x128xf32>
    %49 = vector.shape_cast %48 : vector<1x8x128xf32> to vector<8x128xf32>
    %50 = arith.addf %49, %27 : vector<8x128xf32>
    %51 = arith.negf %50 : vector<8x128xf32>
    %52 = math.exp %51 : vector<8x128xf32>
    %cst_14 = arith.constant 1.000000e+00 : f32
    %53 = vector.broadcast %cst_14 : f32 to vector<8x128xf32>
    %54 = arith.addf %53, %52 : vector<8x128xf32>
    %55 = arith.divf %53, %54 : vector<8x128xf32>
    %56 = math.tanh %50 : vector<8x128xf32>
    %57 = vector.extract_strided_slice %55 {offsets = [0, 0], sizes = [8, 32], strides = [1, 1]} : vector<8x128xf32> to vector<8x32xf32>
    %58 = vector.extract_strided_slice %55 {offsets = [0, 32], sizes = [8, 32], strides = [1, 1]} : vector<8x128xf32> to vector<8x32xf32>
    %59 = vector.extract_strided_slice %56 {offsets = [0, 64], sizes = [8, 32], strides = [1, 1]} : vector<8x128xf32> to vector<8x32xf32>
    %60 = vector.extract_strided_slice %55 {offsets = [0, 96], sizes = [8, 32], strides = [1, 1]} : vector<8x128xf32> to vector<8x32xf32>
    %61 = arith.mulf %58, %23 : vector<8x32xf32>
    %62 = arith.mulf %57, %59 : vector<8x32xf32>
    %63 = arith.addf %61, %62 : vector<8x32xf32>
    %64 = math.tanh %63 : vector<8x32xf32>
    %65 = arith.mulf %60, %64 : vector<8x32xf32>
    %cst_15 = arith.constant dense<0.000000e+00> : vector<8x256xf32>
    %66 = tpu.matmul %65, %0, %cst_15 {dimension_numbers = #tpu.dot_dimension_numbers<[1], [0], [0], [1], [0, 0, 1, 1], [], []>} : vector<8x32xf32>, vector<32x256xf32>, vector<8x256xf32> -> vector<8x256xf32>
    %67 = vector.extract_strided_slice %66 {offsets = [0, 0], sizes = [8, 128], strides = [1, 1]} : vector<8x256xf32> to vector<8x128xf32>
    %68 = vector.extract_strided_slice %66 {offsets = [0, 128], sizes = [8, 128], strides = [1, 1]} : vector<8x256xf32> to vector<8x128xf32>
    %cst_16 = arith.constant dense<0.000000e+00> : vector<8x128xf32>
    %69 = tpu.matmul %46, %1, %cst_16 {dimension_numbers = #tpu.dot_dimension_numbers<[1], [0], [0], [1], [0, 0, 1, 1], [], []>} : vector<8x32xf32>, vector<32x128xf32>, vector<8x128xf32> -> vector<8x128xf32>
    %70 = arith.addf %68, %69 : vector<8x128xf32>
    %71 = arith.addf %70, %4 : vector<8x128xf32>
    %72 = arith.negf %71 : vector<8x128xf32>
    %73 = math.exp %72 : vector<8x128xf32>
    %cst_17 = arith.constant 1.000000e+00 : f32
    %74 = vector.broadcast %cst_17 : f32 to vector<8x128xf32>
    %75 = arith.addf %74, %73 : vector<8x128xf32>
    %76 = arith.divf %74, %75 : vector<8x128xf32>
    %77 = math.tanh %71 : vector<8x128xf32>
    %78 = vector.extract_strided_slice %76 {offsets = [0, 0], sizes = [8, 32], strides = [1, 1]} : vector<8x128xf32> to vector<8x32xf32>
    %79 = vector.extract_strided_slice %76 {offsets = [0, 32], sizes = [8, 32], strides = [1, 1]} : vector<8x128xf32> to vector<8x32xf32>
    %80 = vector.extract_strided_slice %77 {offsets = [0, 64], sizes = [8, 32], strides = [1, 1]} : vector<8x128xf32> to vector<8x32xf32>
    %81 = vector.extract_strided_slice %76 {offsets = [0, 96], sizes = [8, 32], strides = [1, 1]} : vector<8x128xf32> to vector<8x32xf32>
    %82 = arith.mulf %79, %44 : vector<8x32xf32>
    %83 = arith.mulf %78, %80 : vector<8x32xf32>
    %84 = arith.addf %82, %83 : vector<8x32xf32>
    %85 = math.tanh %84 : vector<8x32xf32>
    %86 = arith.mulf %81, %85 : vector<8x32xf32>
    %c2_i32 = arith.constant 2 : i32
    %87 = arith.index_cast %c2_i32 : i32 to index
    %c0_18 = arith.constant 0 : index
    %c0_19 = arith.constant 0 : index
    %88 = vector.load %arg0[%87, %c0_18, %c0_19] : memref<8x8x128xf32, #tpu.memory_space<vmem>>, vector<1x8x128xf32>
    %89 = vector.shape_cast %88 : vector<1x8x128xf32> to vector<8x128xf32>
    %90 = arith.addf %89, %67 : vector<8x128xf32>
    %91 = arith.negf %90 : vector<8x128xf32>
    %92 = math.exp %91 : vector<8x128xf32>
    %cst_20 = arith.constant 1.000000e+00 : f32
    %93 = vector.broadcast %cst_20 : f32 to vector<8x128xf32>
    %94 = arith.addf %93, %92 : vector<8x128xf32>
    %95 = arith.divf %93, %94 : vector<8x128xf32>
    %96 = math.tanh %90 : vector<8x128xf32>
    %97 = vector.extract_strided_slice %95 {offsets = [0, 0], sizes = [8, 32], strides = [1, 1]} : vector<8x128xf32> to vector<8x32xf32>
    %98 = vector.extract_strided_slice %95 {offsets = [0, 32], sizes = [8, 32], strides = [1, 1]} : vector<8x128xf32> to vector<8x32xf32>
    %99 = vector.extract_strided_slice %96 {offsets = [0, 64], sizes = [8, 32], strides = [1, 1]} : vector<8x128xf32> to vector<8x32xf32>
    %100 = vector.extract_strided_slice %95 {offsets = [0, 96], sizes = [8, 32], strides = [1, 1]} : vector<8x128xf32> to vector<8x32xf32>
    %101 = arith.mulf %98, %63 : vector<8x32xf32>
    %102 = arith.mulf %97, %99 : vector<8x32xf32>
    %103 = arith.addf %101, %102 : vector<8x32xf32>
    %104 = math.tanh %103 : vector<8x32xf32>
    %105 = arith.mulf %100, %104 : vector<8x32xf32>
    %cst_21 = arith.constant dense<0.000000e+00> : vector<8x256xf32>
    %106 = tpu.matmul %105, %0, %cst_21 {dimension_numbers = #tpu.dot_dimension_numbers<[1], [0], [0], [1], [0, 0, 1, 1], [], []>} : vector<8x32xf32>, vector<32x256xf32>, vector<8x256xf32> -> vector<8x256xf32>
    %107 = vector.extract_strided_slice %106 {offsets = [0, 0], sizes = [8, 128], strides = [1, 1]} : vector<8x256xf32> to vector<8x128xf32>
    %108 = vector.extract_strided_slice %106 {offsets = [0, 128], sizes = [8, 128], strides = [1, 1]} : vector<8x256xf32> to vector<8x128xf32>
    %cst_22 = arith.constant dense<0.000000e+00> : vector<8x128xf32>
    %109 = tpu.matmul %86, %1, %cst_22 {dimension_numbers = #tpu.dot_dimension_numbers<[1], [0], [0], [1], [0, 0, 1, 1], [], []>} : vector<8x32xf32>, vector<32x128xf32>, vector<8x128xf32> -> vector<8x128xf32>
    %110 = arith.addf %108, %109 : vector<8x128xf32>
    %111 = arith.addf %110, %4 : vector<8x128xf32>
    %112 = arith.negf %111 : vector<8x128xf32>
    %113 = math.exp %112 : vector<8x128xf32>
    %cst_23 = arith.constant 1.000000e+00 : f32
    %114 = vector.broadcast %cst_23 : f32 to vector<8x128xf32>
    %115 = arith.addf %114, %113 : vector<8x128xf32>
    %116 = arith.divf %114, %115 : vector<8x128xf32>
    %117 = math.tanh %111 : vector<8x128xf32>
    %118 = vector.extract_strided_slice %116 {offsets = [0, 0], sizes = [8, 32], strides = [1, 1]} : vector<8x128xf32> to vector<8x32xf32>
    %119 = vector.extract_strided_slice %116 {offsets = [0, 32], sizes = [8, 32], strides = [1, 1]} : vector<8x128xf32> to vector<8x32xf32>
    %120 = vector.extract_strided_slice %117 {offsets = [0, 64], sizes = [8, 32], strides = [1, 1]} : vector<8x128xf32> to vector<8x32xf32>
    %121 = vector.extract_strided_slice %116 {offsets = [0, 96], sizes = [8, 32], strides = [1, 1]} : vector<8x128xf32> to vector<8x32xf32>
    %122 = arith.mulf %119, %84 : vector<8x32xf32>
    %123 = arith.mulf %118, %120 : vector<8x32xf32>
    %124 = arith.addf %122, %123 : vector<8x32xf32>
    %125 = math.tanh %124 : vector<8x32xf32>
    %126 = arith.mulf %121, %125 : vector<8x32xf32>
    %c3_i32 = arith.constant 3 : i32
    %127 = arith.index_cast %c3_i32 : i32 to index
    %c0_24 = arith.constant 0 : index
    %c0_25 = arith.constant 0 : index
    %128 = vector.load %arg0[%127, %c0_24, %c0_25] : memref<8x8x128xf32, #tpu.memory_space<vmem>>, vector<1x8x128xf32>
    %129 = vector.shape_cast %128 : vector<1x8x128xf32> to vector<8x128xf32>
    %130 = arith.addf %129, %107 : vector<8x128xf32>
    %131 = arith.negf %130 : vector<8x128xf32>
    %132 = math.exp %131 : vector<8x128xf32>
    %cst_26 = arith.constant 1.000000e+00 : f32
    %133 = vector.broadcast %cst_26 : f32 to vector<8x128xf32>
    %134 = arith.addf %133, %132 : vector<8x128xf32>
    %135 = arith.divf %133, %134 : vector<8x128xf32>
    %136 = math.tanh %130 : vector<8x128xf32>
    %137 = vector.extract_strided_slice %135 {offsets = [0, 0], sizes = [8, 32], strides = [1, 1]} : vector<8x128xf32> to vector<8x32xf32>
    %138 = vector.extract_strided_slice %135 {offsets = [0, 32], sizes = [8, 32], strides = [1, 1]} : vector<8x128xf32> to vector<8x32xf32>
    %139 = vector.extract_strided_slice %136 {offsets = [0, 64], sizes = [8, 32], strides = [1, 1]} : vector<8x128xf32> to vector<8x32xf32>
    %140 = vector.extract_strided_slice %135 {offsets = [0, 96], sizes = [8, 32], strides = [1, 1]} : vector<8x128xf32> to vector<8x32xf32>
    %141 = arith.mulf %138, %103 : vector<8x32xf32>
    %142 = arith.mulf %137, %139 : vector<8x32xf32>
    %143 = arith.addf %141, %142 : vector<8x32xf32>
    %144 = math.tanh %143 : vector<8x32xf32>
    %145 = arith.mulf %140, %144 : vector<8x32xf32>
    %cst_27 = arith.constant dense<0.000000e+00> : vector<8x256xf32>
    %146 = tpu.matmul %145, %0, %cst_27 {dimension_numbers = #tpu.dot_dimension_numbers<[1], [0], [0], [1], [0, 0, 1, 1], [], []>} : vector<8x32xf32>, vector<32x256xf32>, vector<8x256xf32> -> vector<8x256xf32>
    %147 = vector.extract_strided_slice %146 {offsets = [0, 0], sizes = [8, 128], strides = [1, 1]} : vector<8x256xf32> to vector<8x128xf32>
    %148 = vector.extract_strided_slice %146 {offsets = [0, 128], sizes = [8, 128], strides = [1, 1]} : vector<8x256xf32> to vector<8x128xf32>
    %cst_28 = arith.constant dense<0.000000e+00> : vector<8x128xf32>
    %149 = tpu.matmul %126, %1, %cst_28 {dimension_numbers = #tpu.dot_dimension_numbers<[1], [0], [0], [1], [0, 0, 1, 1], [], []>} : vector<8x32xf32>, vector<32x128xf32>, vector<8x128xf32> -> vector<8x128xf32>
    %150 = arith.addf %148, %149 : vector<8x128xf32>
    %151 = arith.addf %150, %4 : vector<8x128xf32>
    %152 = arith.negf %151 : vector<8x128xf32>
    %153 = math.exp %152 : vector<8x128xf32>
    %cst_29 = arith.constant 1.000000e+00 : f32
    %154 = vector.broadcast %cst_29 : f32 to vector<8x128xf32>
    %155 = arith.addf %154, %153 : vector<8x128xf32>
    %156 = arith.divf %154, %155 : vector<8x128xf32>
    %157 = math.tanh %151 : vector<8x128xf32>
    %158 = vector.extract_strided_slice %156 {offsets = [0, 0], sizes = [8, 32], strides = [1, 1]} : vector<8x128xf32> to vector<8x32xf32>
    %159 = vector.extract_strided_slice %156 {offsets = [0, 32], sizes = [8, 32], strides = [1, 1]} : vector<8x128xf32> to vector<8x32xf32>
    %160 = vector.extract_strided_slice %157 {offsets = [0, 64], sizes = [8, 32], strides = [1, 1]} : vector<8x128xf32> to vector<8x32xf32>
    %161 = vector.extract_strided_slice %156 {offsets = [0, 96], sizes = [8, 32], strides = [1, 1]} : vector<8x128xf32> to vector<8x32xf32>
    %162 = arith.mulf %159, %124 : vector<8x32xf32>
    %163 = arith.mulf %158, %160 : vector<8x32xf32>
    %164 = arith.addf %162, %163 : vector<8x32xf32>
    %165 = math.tanh %164 : vector<8x32xf32>
    %166 = arith.mulf %161, %165 : vector<8x32xf32>
    %c4_i32 = arith.constant 4 : i32
    %167 = arith.index_cast %c4_i32 : i32 to index
    %c0_30 = arith.constant 0 : index
    %c0_31 = arith.constant 0 : index
    %168 = vector.load %arg0[%167, %c0_30, %c0_31] : memref<8x8x128xf32, #tpu.memory_space<vmem>>, vector<1x8x128xf32>
    %169 = vector.shape_cast %168 : vector<1x8x128xf32> to vector<8x128xf32>
    %170 = arith.addf %169, %147 : vector<8x128xf32>
    %171 = arith.negf %170 : vector<8x128xf32>
    %172 = math.exp %171 : vector<8x128xf32>
    %cst_32 = arith.constant 1.000000e+00 : f32
    %173 = vector.broadcast %cst_32 : f32 to vector<8x128xf32>
    %174 = arith.addf %173, %172 : vector<8x128xf32>
    %175 = arith.divf %173, %174 : vector<8x128xf32>
    %176 = math.tanh %170 : vector<8x128xf32>
    %177 = vector.extract_strided_slice %175 {offsets = [0, 0], sizes = [8, 32], strides = [1, 1]} : vector<8x128xf32> to vector<8x32xf32>
    %178 = vector.extract_strided_slice %175 {offsets = [0, 32], sizes = [8, 32], strides = [1, 1]} : vector<8x128xf32> to vector<8x32xf32>
    %179 = vector.extract_strided_slice %176 {offsets = [0, 64], sizes = [8, 32], strides = [1, 1]} : vector<8x128xf32> to vector<8x32xf32>
    %180 = vector.extract_strided_slice %175 {offsets = [0, 96], sizes = [8, 32], strides = [1, 1]} : vector<8x128xf32> to vector<8x32xf32>
    %181 = arith.mulf %178, %143 : vector<8x32xf32>
    %182 = arith.mulf %177, %179 : vector<8x32xf32>
    %183 = arith.addf %181, %182 : vector<8x32xf32>
    %184 = math.tanh %183 : vector<8x32xf32>
    %185 = arith.mulf %180, %184 : vector<8x32xf32>
    %cst_33 = arith.constant dense<0.000000e+00> : vector<8x256xf32>
    %186 = tpu.matmul %185, %0, %cst_33 {dimension_numbers = #tpu.dot_dimension_numbers<[1], [0], [0], [1], [0, 0, 1, 1], [], []>} : vector<8x32xf32>, vector<32x256xf32>, vector<8x256xf32> -> vector<8x256xf32>
    %187 = vector.extract_strided_slice %186 {offsets = [0, 0], sizes = [8, 128], strides = [1, 1]} : vector<8x256xf32> to vector<8x128xf32>
    %188 = vector.extract_strided_slice %186 {offsets = [0, 128], sizes = [8, 128], strides = [1, 1]} : vector<8x256xf32> to vector<8x128xf32>
    %cst_34 = arith.constant dense<0.000000e+00> : vector<8x128xf32>
    %189 = tpu.matmul %166, %1, %cst_34 {dimension_numbers = #tpu.dot_dimension_numbers<[1], [0], [0], [1], [0, 0, 1, 1], [], []>} : vector<8x32xf32>, vector<32x128xf32>, vector<8x128xf32> -> vector<8x128xf32>
    %190 = arith.addf %188, %189 : vector<8x128xf32>
    %191 = arith.addf %190, %4 : vector<8x128xf32>
    %192 = arith.negf %191 : vector<8x128xf32>
    %193 = math.exp %192 : vector<8x128xf32>
    %cst_35 = arith.constant 1.000000e+00 : f32
    %194 = vector.broadcast %cst_35 : f32 to vector<8x128xf32>
    %195 = arith.addf %194, %193 : vector<8x128xf32>
    %196 = arith.divf %194, %195 : vector<8x128xf32>
    %197 = math.tanh %191 : vector<8x128xf32>
    %198 = vector.extract_strided_slice %196 {offsets = [0, 0], sizes = [8, 32], strides = [1, 1]} : vector<8x128xf32> to vector<8x32xf32>
    %199 = vector.extract_strided_slice %196 {offsets = [0, 32], sizes = [8, 32], strides = [1, 1]} : vector<8x128xf32> to vector<8x32xf32>
    %200 = vector.extract_strided_slice %197 {offsets = [0, 64], sizes = [8, 32], strides = [1, 1]} : vector<8x128xf32> to vector<8x32xf32>
    %201 = vector.extract_strided_slice %196 {offsets = [0, 96], sizes = [8, 32], strides = [1, 1]} : vector<8x128xf32> to vector<8x32xf32>
    %202 = arith.mulf %199, %164 : vector<8x32xf32>
    %203 = arith.mulf %198, %200 : vector<8x32xf32>
    %204 = arith.addf %202, %203 : vector<8x32xf32>
    %205 = math.tanh %204 : vector<8x32xf32>
    %206 = arith.mulf %201, %205 : vector<8x32xf32>
    %c5_i32 = arith.constant 5 : i32
    %207 = arith.index_cast %c5_i32 : i32 to index
    %c0_36 = arith.constant 0 : index
    %c0_37 = arith.constant 0 : index
    %208 = vector.load %arg0[%207, %c0_36, %c0_37] : memref<8x8x128xf32, #tpu.memory_space<vmem>>, vector<1x8x128xf32>
    %209 = vector.shape_cast %208 : vector<1x8x128xf32> to vector<8x128xf32>
    %210 = arith.addf %209, %187 : vector<8x128xf32>
    %211 = arith.negf %210 : vector<8x128xf32>
    %212 = math.exp %211 : vector<8x128xf32>
    %cst_38 = arith.constant 1.000000e+00 : f32
    %213 = vector.broadcast %cst_38 : f32 to vector<8x128xf32>
    %214 = arith.addf %213, %212 : vector<8x128xf32>
    %215 = arith.divf %213, %214 : vector<8x128xf32>
    %216 = math.tanh %210 : vector<8x128xf32>
    %217 = vector.extract_strided_slice %215 {offsets = [0, 0], sizes = [8, 32], strides = [1, 1]} : vector<8x128xf32> to vector<8x32xf32>
    %218 = vector.extract_strided_slice %215 {offsets = [0, 32], sizes = [8, 32], strides = [1, 1]} : vector<8x128xf32> to vector<8x32xf32>
    %219 = vector.extract_strided_slice %216 {offsets = [0, 64], sizes = [8, 32], strides = [1, 1]} : vector<8x128xf32> to vector<8x32xf32>
    %220 = vector.extract_strided_slice %215 {offsets = [0, 96], sizes = [8, 32], strides = [1, 1]} : vector<8x128xf32> to vector<8x32xf32>
    %221 = arith.mulf %218, %183 : vector<8x32xf32>
    %222 = arith.mulf %217, %219 : vector<8x32xf32>
    %223 = arith.addf %221, %222 : vector<8x32xf32>
    %224 = math.tanh %223 : vector<8x32xf32>
    %225 = arith.mulf %220, %224 : vector<8x32xf32>
    %cst_39 = arith.constant dense<0.000000e+00> : vector<8x256xf32>
    %226 = tpu.matmul %225, %0, %cst_39 {dimension_numbers = #tpu.dot_dimension_numbers<[1], [0], [0], [1], [0, 0, 1, 1], [], []>} : vector<8x32xf32>, vector<32x256xf32>, vector<8x256xf32> -> vector<8x256xf32>
    %227 = vector.extract_strided_slice %226 {offsets = [0, 0], sizes = [8, 128], strides = [1, 1]} : vector<8x256xf32> to vector<8x128xf32>
    %228 = vector.extract_strided_slice %226 {offsets = [0, 128], sizes = [8, 128], strides = [1, 1]} : vector<8x256xf32> to vector<8x128xf32>
    %cst_40 = arith.constant dense<0.000000e+00> : vector<8x128xf32>
    %229 = tpu.matmul %206, %1, %cst_40 {dimension_numbers = #tpu.dot_dimension_numbers<[1], [0], [0], [1], [0, 0, 1, 1], [], []>} : vector<8x32xf32>, vector<32x128xf32>, vector<8x128xf32> -> vector<8x128xf32>
    %230 = arith.addf %228, %229 : vector<8x128xf32>
    %231 = arith.addf %230, %4 : vector<8x128xf32>
    %232 = arith.negf %231 : vector<8x128xf32>
    %233 = math.exp %232 : vector<8x128xf32>
    %cst_41 = arith.constant 1.000000e+00 : f32
    %234 = vector.broadcast %cst_41 : f32 to vector<8x128xf32>
    %235 = arith.addf %234, %233 : vector<8x128xf32>
    %236 = arith.divf %234, %235 : vector<8x128xf32>
    %237 = math.tanh %231 : vector<8x128xf32>
    %238 = vector.extract_strided_slice %236 {offsets = [0, 0], sizes = [8, 32], strides = [1, 1]} : vector<8x128xf32> to vector<8x32xf32>
    %239 = vector.extract_strided_slice %236 {offsets = [0, 32], sizes = [8, 32], strides = [1, 1]} : vector<8x128xf32> to vector<8x32xf32>
    %240 = vector.extract_strided_slice %237 {offsets = [0, 64], sizes = [8, 32], strides = [1, 1]} : vector<8x128xf32> to vector<8x32xf32>
    %241 = vector.extract_strided_slice %236 {offsets = [0, 96], sizes = [8, 32], strides = [1, 1]} : vector<8x128xf32> to vector<8x32xf32>
    %242 = arith.mulf %239, %204 : vector<8x32xf32>
    %243 = arith.mulf %238, %240 : vector<8x32xf32>
    %244 = arith.addf %242, %243 : vector<8x32xf32>
    %245 = math.tanh %244 : vector<8x32xf32>
    %246 = arith.mulf %241, %245 : vector<8x32xf32>
    %c6_i32 = arith.constant 6 : i32
    %247 = arith.index_cast %c6_i32 : i32 to index
    %c0_42 = arith.constant 0 : index
    %c0_43 = arith.constant 0 : index
    %248 = vector.load %arg0[%247, %c0_42, %c0_43] : memref<8x8x128xf32, #tpu.memory_space<vmem>>, vector<1x8x128xf32>
    %249 = vector.shape_cast %248 : vector<1x8x128xf32> to vector<8x128xf32>
    %250 = arith.addf %249, %227 : vector<8x128xf32>
    %251 = arith.negf %250 : vector<8x128xf32>
    %252 = math.exp %251 : vector<8x128xf32>
    %cst_44 = arith.constant 1.000000e+00 : f32
    %253 = vector.broadcast %cst_44 : f32 to vector<8x128xf32>
    %254 = arith.addf %253, %252 : vector<8x128xf32>
    %255 = arith.divf %253, %254 : vector<8x128xf32>
    %256 = math.tanh %250 : vector<8x128xf32>
    %257 = vector.extract_strided_slice %255 {offsets = [0, 0], sizes = [8, 32], strides = [1, 1]} : vector<8x128xf32> to vector<8x32xf32>
    %258 = vector.extract_strided_slice %255 {offsets = [0, 32], sizes = [8, 32], strides = [1, 1]} : vector<8x128xf32> to vector<8x32xf32>
    %259 = vector.extract_strided_slice %256 {offsets = [0, 64], sizes = [8, 32], strides = [1, 1]} : vector<8x128xf32> to vector<8x32xf32>
    %260 = vector.extract_strided_slice %255 {offsets = [0, 96], sizes = [8, 32], strides = [1, 1]} : vector<8x128xf32> to vector<8x32xf32>
    %261 = arith.mulf %258, %223 : vector<8x32xf32>
    %262 = arith.mulf %257, %259 : vector<8x32xf32>
    %263 = arith.addf %261, %262 : vector<8x32xf32>
    %264 = math.tanh %263 : vector<8x32xf32>
    %265 = arith.mulf %260, %264 : vector<8x32xf32>
    %cst_45 = arith.constant dense<0.000000e+00> : vector<8x256xf32>
    %266 = tpu.matmul %265, %0, %cst_45 {dimension_numbers = #tpu.dot_dimension_numbers<[1], [0], [0], [1], [0, 0, 1, 1], [], []>} : vector<8x32xf32>, vector<32x256xf32>, vector<8x256xf32> -> vector<8x256xf32>
    %267 = vector.extract_strided_slice %266 {offsets = [0, 0], sizes = [8, 128], strides = [1, 1]} : vector<8x256xf32> to vector<8x128xf32>
    %268 = vector.extract_strided_slice %266 {offsets = [0, 128], sizes = [8, 128], strides = [1, 1]} : vector<8x256xf32> to vector<8x128xf32>
    %cst_46 = arith.constant dense<0.000000e+00> : vector<8x128xf32>
    %269 = tpu.matmul %246, %1, %cst_46 {dimension_numbers = #tpu.dot_dimension_numbers<[1], [0], [0], [1], [0, 0, 1, 1], [], []>} : vector<8x32xf32>, vector<32x128xf32>, vector<8x128xf32> -> vector<8x128xf32>
    %270 = arith.addf %268, %269 : vector<8x128xf32>
    %271 = arith.addf %270, %4 : vector<8x128xf32>
    %272 = arith.negf %271 : vector<8x128xf32>
    %273 = math.exp %272 : vector<8x128xf32>
    %cst_47 = arith.constant 1.000000e+00 : f32
    %274 = vector.broadcast %cst_47 : f32 to vector<8x128xf32>
    %275 = arith.addf %274, %273 : vector<8x128xf32>
    %276 = arith.divf %274, %275 : vector<8x128xf32>
    %277 = math.tanh %271 : vector<8x128xf32>
    %278 = vector.extract_strided_slice %276 {offsets = [0, 0], sizes = [8, 32], strides = [1, 1]} : vector<8x128xf32> to vector<8x32xf32>
    %279 = vector.extract_strided_slice %276 {offsets = [0, 32], sizes = [8, 32], strides = [1, 1]} : vector<8x128xf32> to vector<8x32xf32>
    %280 = vector.extract_strided_slice %277 {offsets = [0, 64], sizes = [8, 32], strides = [1, 1]} : vector<8x128xf32> to vector<8x32xf32>
    %281 = vector.extract_strided_slice %276 {offsets = [0, 96], sizes = [8, 32], strides = [1, 1]} : vector<8x128xf32> to vector<8x32xf32>
    %282 = arith.mulf %279, %244 : vector<8x32xf32>
    %283 = arith.mulf %278, %280 : vector<8x32xf32>
    %284 = arith.addf %282, %283 : vector<8x32xf32>
    %285 = math.tanh %284 : vector<8x32xf32>
    %286 = arith.mulf %281, %285 : vector<8x32xf32>
    %c7_i32 = arith.constant 7 : i32
    %287 = arith.index_cast %c7_i32 : i32 to index
    %c0_48 = arith.constant 0 : index
    %c0_49 = arith.constant 0 : index
    %288 = vector.load %arg0[%287, %c0_48, %c0_49] : memref<8x8x128xf32, #tpu.memory_space<vmem>>, vector<1x8x128xf32>
    %289 = vector.shape_cast %288 : vector<1x8x128xf32> to vector<8x128xf32>
    %290 = arith.addf %289, %267 : vector<8x128xf32>
    %291 = arith.negf %290 : vector<8x128xf32>
    %292 = math.exp %291 : vector<8x128xf32>
    %cst_50 = arith.constant 1.000000e+00 : f32
    %293 = vector.broadcast %cst_50 : f32 to vector<8x128xf32>
    %294 = arith.addf %293, %292 : vector<8x128xf32>
    %295 = arith.divf %293, %294 : vector<8x128xf32>
    %296 = math.tanh %290 : vector<8x128xf32>
    %297 = vector.extract_strided_slice %295 {offsets = [0, 0], sizes = [8, 32], strides = [1, 1]} : vector<8x128xf32> to vector<8x32xf32>
    %298 = vector.extract_strided_slice %295 {offsets = [0, 32], sizes = [8, 32], strides = [1, 1]} : vector<8x128xf32> to vector<8x32xf32>
    %299 = vector.extract_strided_slice %296 {offsets = [0, 64], sizes = [8, 32], strides = [1, 1]} : vector<8x128xf32> to vector<8x32xf32>
    %300 = vector.extract_strided_slice %295 {offsets = [0, 96], sizes = [8, 32], strides = [1, 1]} : vector<8x128xf32> to vector<8x32xf32>
    %301 = arith.mulf %298, %263 : vector<8x32xf32>
    %302 = arith.mulf %297, %299 : vector<8x32xf32>
    %303 = arith.addf %301, %302 : vector<8x32xf32>
    %304 = math.tanh %303 : vector<8x32xf32>
    %305 = arith.mulf %300, %304 : vector<8x32xf32>
    %cst_51 = arith.constant dense<0.000000e+00> : vector<8x256xf32>
    %306 = tpu.matmul %305, %0, %cst_51 {dimension_numbers = #tpu.dot_dimension_numbers<[1], [0], [0], [1], [0, 0, 1, 1], [], []>} : vector<8x32xf32>, vector<32x256xf32>, vector<8x256xf32> -> vector<8x256xf32>
    %307 = vector.extract_strided_slice %306 {offsets = [0, 0], sizes = [8, 128], strides = [1, 1]} : vector<8x256xf32> to vector<8x128xf32>
    %308 = vector.extract_strided_slice %306 {offsets = [0, 128], sizes = [8, 128], strides = [1, 1]} : vector<8x256xf32> to vector<8x128xf32>
    %cst_52 = arith.constant dense<0.000000e+00> : vector<8x128xf32>
    %309 = tpu.matmul %286, %1, %cst_52 {dimension_numbers = #tpu.dot_dimension_numbers<[1], [0], [0], [1], [0, 0, 1, 1], [], []>} : vector<8x32xf32>, vector<32x128xf32>, vector<8x128xf32> -> vector<8x128xf32>
    %310 = arith.addf %308, %309 : vector<8x128xf32>
    %311 = arith.addf %310, %4 : vector<8x128xf32>
    %312 = arith.negf %311 : vector<8x128xf32>
    %313 = math.exp %312 : vector<8x128xf32>
    %cst_53 = arith.constant 1.000000e+00 : f32
    %314 = vector.broadcast %cst_53 : f32 to vector<8x128xf32>
    %315 = arith.addf %314, %313 : vector<8x128xf32>
    %316 = arith.divf %314, %315 : vector<8x128xf32>
    %317 = math.tanh %311 : vector<8x128xf32>
    %318 = vector.extract_strided_slice %316 {offsets = [0, 0], sizes = [8, 32], strides = [1, 1]} : vector<8x128xf32> to vector<8x32xf32>
    %319 = vector.extract_strided_slice %316 {offsets = [0, 32], sizes = [8, 32], strides = [1, 1]} : vector<8x128xf32> to vector<8x32xf32>
    %320 = vector.extract_strided_slice %317 {offsets = [0, 64], sizes = [8, 32], strides = [1, 1]} : vector<8x128xf32> to vector<8x32xf32>
    %321 = vector.extract_strided_slice %316 {offsets = [0, 96], sizes = [8, 32], strides = [1, 1]} : vector<8x128xf32> to vector<8x32xf32>
    %322 = arith.mulf %319, %284 : vector<8x32xf32>
    %323 = arith.mulf %318, %320 : vector<8x32xf32>
    %324 = arith.addf %322, %323 : vector<8x32xf32>
    %325 = math.tanh %324 : vector<8x32xf32>
    %326 = arith.mulf %321, %325 : vector<8x32xf32>
    %c8_i32 = arith.constant 8 : i32
    %c0_54 = arith.constant 0 : index
    %c0_55 = arith.constant 0 : index
    %327 = vector.load %arg4[%c0_54, %c0_55] : memref<8x32xf32, #tpu.memory_space<vmem>>, vector<8x32xf32>
    tpu.vector_store %arg4[%c0_54, %c0_55], %326 {strides = array<i32>} : memref<8x32xf32, #tpu.memory_space<vmem>>, vector<8x32xf32>,
    return
  }
}

</mosaic_0001>

<llo_original>
// kernel: tpu_custom_call.1
$region0: #{tpu_custom_call.1}
  #allocation0 [shape = 'u32[]', space=smem, size = 0x4, offset = 0x4, fixed_abs, tag = 'smem constant byte address 0x4 - core index']
  #allocation1 [shape = 'u32[72,128]{1,0:T(1,128)}', space=vmem, size = 0x9000, scoped, tag = 'internal scratch']
  %s0 = inlined_call_operand.hbm [shape: f32[8,8,128], index: 0, kind: input, shape index: {}]
  %s1 = inlined_call_operand.hbm [shape: f32[32,256], index: 1, kind: input, shape index: {}]
  %s2 = inlined_call_operand.hbm [shape: f32[32,128], index: 2, kind: input, shape index: {}]
  %s3 = inlined_call_operand.vmem [shape: f32[1,128], index: 3, kind: input, shape index: {}]
  %s4 = inlined_call_operand.hbm [shape: f32[8,32], index: 4, kind: output, shape index: {}]
  %s5 = sld [smem:[#allocation0]]
  $region38: #{tpu_custom_call.1} parent=0
    _
  %s7 = ssub.s32 1, %s5
  %s8 = scalar_select 0, %s7, %s5
  $region1: #{tpu_custom_call.1} parent=0
    #allocation2 [shape = 'u8[32768]{0}', space=vmem, size = 0x8000, scoped, tag = 'input window, operand 0, single buffered']
    #allocation3 [shape = 's32[1]{0}', space=sflag, size = 0x4, scoped, tag = 'scoped memory for tpu_custom_call.1']
    #allocation4 [shape = 's32[1]{0}', space=sflag, size = 0x4, scoped, tag = 'scoped memory for tpu_custom_call.1']
    #allocation5 [shape = 'u8[32768]{0}', space=vmem, size = 0x8000, scoped, tag = 'input window, operand 1, single buffered']
    #allocation6 [shape = 's32[1]{0}', space=sflag, size = 0x4, scoped, tag = 'scoped memory for tpu_custom_call.1']
    #allocation7 [shape = 'u8[16384]{0}', space=vmem, size = 0x4000, scoped, tag = 'input window, operand 2, single buffered']
    #allocation8 [shape = 'u8[4096]{0}', space=vmem, size = 0x1000, scoped, tag = 'output window, operand 0, single buffered']
    %9 = vsyncpa [#allocation3], 0
    %10 = vsyncpa [#allocation6], 0
    %11 = vsyncpa [#allocation4], 0
    // Predicated region
    $region2: #{tpu_custom_call.1} parent=1 // pred_check
      _
    $region3: #{tpu_custom_call.1} parent=1 // pred_check_branch
      %13 = sbr.rel (0) target = $region5
    $region4: #{tpu_custom_call.1} parent=1 // pred_region
      %15 = vsyncadd [#allocation3], 0
      %s16 = sshll.u32 %s0, 4
      %s17 = int_to_ptr.hbm [resolvable:$true] %s16
      %s18 = sshll.u32 [#allocation2], 4
      %s19 = int_to_ptr.vmem [resolvable:$true] %s18
      %24 = dma.hbm_to_vmem [thread:$0]  %s17, 1024, %s19, [#allocation3], 128, 128, 8
    $region5: #{tpu_custom_call.1} parent=1 // pred_fallthru
      _
    // Predicated region
    $region6: #{tpu_custom_call.1} parent=1 // pred_check
      _
    $region7: #{tpu_custom_call.1} parent=1 // pred_check_branch
      %26 = sbr.rel (0) target = $region9
    $region8: #{tpu_custom_call.1} parent=1 // pred_region
      %28 = vsyncadd [#allocation6], 0
      %s29 = sshll.u32 %s1, 4
      %s30 = int_to_ptr.hbm [resolvable:$true] %s29
      %s31 = sshll.u32 [#allocation5], 4
      %s32 = int_to_ptr.vmem [resolvable:$true] %s31
      %37 = dma.hbm_to_vmem [thread:$0]  %s30, 1024, %s32, [#allocation6], 256, 256, 16
    $region9: #{tpu_custom_call.1} parent=1 // pred_fallthru
      _
    // Predicated region
    $region10: #{tpu_custom_call.1} parent=1 // pred_check
      _
    $region11: #{tpu_custom_call.1} parent=1 // pred_check_branch
      %39 = sbr.rel (0) target = $region13
    $region12: #{tpu_custom_call.1} parent=1 // pred_region
      %41 = vsyncadd [#allocation6], 0
      %s42 = sshll.u32 %s2, 4
      %s43 = int_to_ptr.hbm [resolvable:$true] %s42
      %s44 = sshll.u32 [#allocation7], 4
      %s45 = int_to_ptr.vmem [resolvable:$true] %s44
      %50 = dma.hbm_to_vmem [thread:$0]  %s43, 512, %s45, [#allocation6], 128, 128, 8
    $region13: #{tpu_custom_call.1} parent=1 // pred_fallthru
      _
    // Predicated region
    $region14: #{tpu_custom_call.1} parent=1 // pred_check
      _
    $region15: #{tpu_custom_call.1} parent=1 // pred_check_branch
      %52 = sbr.rel (0) target = $region17
    $region16: #{tpu_custom_call.1} parent=1 // pred_region
      _
    $region17: #{tpu_custom_call.1} parent=1 // pred_fallthru
      _
    // Predicated region
    $region18: #{tpu_custom_call.1} parent=1 // pred_check
      _
    $region19: #{tpu_custom_call.1} parent=1 // pred_check_branch
      %54 = sbr.rel (0) target = $region21
    $region20: #{tpu_custom_call.1} parent=1 // pred_region
      %56 = dma.done [#allocation3], 1024
    $region21: #{tpu_custom_call.1} parent=1 // pred_fallthru
      _
    // Predicated region
    $region22: #{tpu_custom_call.1} parent=1 // pred_check
      _
    $region23: #{tpu_custom_call.1} parent=1 // pred_check_branch
      %58 = sbr.rel (0) target = $region25
    $region24: #{tpu_custom_call.1} parent=1 // pred_region
      %60 = dma.done [#allocation6], 1024
    $region25: #{tpu_custom_call.1} parent=1 // pred_fallthru
      _
    // Predicated region
    $region26: #{tpu_custom_call.1} parent=1 // pred_check
      _
    $region27: #{tpu_custom_call.1} parent=1 // pred_check_branch
      %62 = sbr.rel (0) target = $region29
    $region28: #{tpu_custom_call.1} parent=1 // pred_region
      %64 = dma.done [#allocation6], 512
    $region29: #{tpu_custom_call.1} parent=1 // pred_fallthru
      _
    %v65 = vld [vmem:[#allocation5] sm:$0xff]
    %v66 = vld [vmem:[#allocation5 + $0x8] sm:$0xff]
    %v67 = vld [vmem:[#allocation5 + $0x10] sm:$0xff]
    %v68 = vld [vmem:[#allocation5 + $0x18] sm:$0xff]
    %v69 = vld [vmem:[#allocation5 + $0x20] sm:$0xff]
    %v70 = vld [vmem:[#allocation5 + $0x28] sm:$0xff]
    %v71 = vld [vmem:[#allocation5 + $0x30] sm:$0xff]
    %v72 = vld [vmem:[#allocation5 + $0x38] sm:$0xff]
    %v73 = vld [vmem:[#allocation7] sm:$0xff]
    %v74 = vld [vmem:[#allocation7 + $0x8] sm:$0xff]
    %v75 = vld [vmem:[#allocation7 + $0x10] sm:$0xff]
    %v76 = vld [vmem:[#allocation7 + $0x18] sm:$0xff]
    %v77 = vld [vmem:[%s3] sm:$0x1]
    %v79 = vperm.slane %v77, 0
    %v81 = vld [vmem:[#allocation2] sm:$0xff]
    %v82 = vadd.f32 %v81, 0.0
    %v83 = vxor.u32 %v82, 2147483648
    %v84 = vmul.f32 %v83, 1.442695
    %v85 = vpow.pop %v84
    %v86 = vadd.f32 %v85, 1.0
    %v87 = vrcp.pop %v86
    %v88 = vmul.f32 %v86, %v87
    %v89 = vsub.f32 1.0, %v88
    %v90 = vmul.f32 %v87, %v89
    %v91 = vadd.f32 %v87, %v90
    %vm92 = vweird.f32 %v86
    %vm93 = vweird.f32 %v87
    %vm94 = vmor %vm92, %vm93
    %v95 = vsel %vm94, %v87, %v91
    %v96 = vand.u32 2147483647, %v86
    %vm97 = vcmp.eq.f32.partialorder %v96, 8.507059e+37
    %v98 = vand.u32 %v86, 2147483648
    %v99 = vor.u32 1.1754944e-38, %v98
    %v100 = vsel %vm97, %v99, %v95
    %v101 = vmul.f32 1.0, %v100
    %v102 = vtanh.pop %v82
    %v103 = vmul.f32 %v101, 0.0
    %105 = vrot.lane.b32.xlu0 %v102, 64
    %v106 = vpop.permute.xlu0 %105
    %v108 = vmul.f32 %v101, %v106
    %110 = vrot.lane.b32.xlu0 %v108, 32
    %v111 = vpop.permute.xlu0 %110
    %v113 = vadd.f32 %v103, %v111
    %v114 = vtanh.pop %v113
    %116 = vrot.lane.b32.xlu0 %v114, 64
    %v117 = vpop.permute.xlu0 %116
    %v119 = vmul.f32 %v101, %v117
    %121 = vrot.lane.b32.xlu0 %v119, 32
    %v122 = vpop.permute.xlu0 %121
    %vm123 = vcmask 261120
    %v124 = vsel %vm123, %v122, 0
    %126 = vmatpush.msra.mxu0 0.0
    %127 = vmatpush.msra.mxu0 0.0
    %128 = vmatpush.msra.mxu0 0.0
    %129 = vmatpush.msra.mxu0 0.0
    %130 = vmatpush.msra.mxu0 0.0
    %131 = vmatpush.msra.mxu0 0.0
    %132 = vmatpush.msra.mxu0 0.0
    %133 = vmatpush.msra.mxu0 0.0
    %134 = vmatpush.msra.mxu0 0.0
    %135 = vmatpush.msra.mxu0 0.0
    %136 = vmatpush.msra.mxu0 0.0
    %137 = vmatpush.msra.mxu0 0.0
    %138 = vmatpush.msra.mxu0 %v71
    %139 = vmatpush.msra.mxu0 %v69
    %140 = vmatpush.msra.mxu0 %v67
    %141 = vmatpush.msra.mxu0 %v65
    %142 = vmatmul.f32.gmra.mxu0 %v124
    %v143 = vpop.f32.mrf.mxu0
    %v144 = vadd.f32 0.0, %v143
    %145 = vdwg.mxu0
    %146 = vmatpush.msra.mxu0 0.0
    %147 = vmatpush.msra.mxu0 0.0
    %148 = vmatpush.msra.mxu0 0.0
    %149 = vmatpush.msra.mxu0 0.0
    %150 = vmatpush.msra.mxu0 0.0
    %151 = vmatpush.msra.mxu0 0.0
    %152 = vmatpush.msra.mxu0 0.0
    %153 = vmatpush.msra.mxu0 0.0
    %154 = vmatpush.msra.mxu0 0.0
    %155 = vmatpush.msra.mxu0 0.0
    %156 = vmatpush.msra.mxu0 0.0
    %157 = vmatpush.msra.mxu0 0.0
    %158 = vmatpush.msra.mxu0 %v72
    %159 = vmatpush.msra.mxu0 %v70
    %160 = vmatpush.msra.mxu0 %v68
    %161 = vmatpush.msra.mxu0 %v66
    %162 = vmatmul.f32.gmra.mxu0 %v124
    %v163 = vpop.f32.mrf.mxu0
    %v164 = vadd.f32 0.0, %v163
    %165 = vdwg.mxu0
    %v167 = vsel %vm123, 0.0, 0
    %169 = vmatpush.msra.mxu0 0.0
    %170 = vmatpush.msra.mxu0 0.0
    %171 = vmatpush.msra.mxu0 0.0
    %172 = vmatpush.msra.mxu0 0.0
    %173 = vmatpush.msra.mxu0 0.0
    %174 = vmatpush.msra.mxu0 0.0
    %175 = vmatpush.msra.mxu0 0.0
    %176 = vmatpush.msra.mxu0 0.0
    %177 = vmatpush.msra.mxu0 0.0
    %178 = vmatpush.msra.mxu0 0.0
    %179 = vmatpush.msra.mxu0 0.0
    %180 = vmatpush.msra.mxu0 0.0
    %181 = vmatpush.msra.mxu0 %v76
    %182 = vmatpush.msra.mxu0 %v75
    %183 = vmatpush.msra.mxu0 %v74
    %184 = vmatpush.msra.mxu0 %v73
    %185 = vmatmul.f32.gmra.mxu0 %v167
    %v186 = vpop.f32.mrf.mxu0
    %v187 = vadd.f32 0.0, %v186
    %188 = vdwg.mxu0
    %v189 = vadd.f32 %v164, %v187
    %v190 = vadd.f32 %v189, %v79
    %v191 = vxor.u32 %v190, 2147483648
    %v192 = vmul.f32 %v191, 1.442695
    %v193 = vpow.pop %v192
    %v194 = vadd.f32 %v193, 1.0
    %v195 = vrcp.pop %v194
    %v196 = vmul.f32 %v194, %v195
    %v197 = vsub.f32 1.0, %v196
    %v198 = vmul.f32 %v195, %v197
    %v199 = vadd.f32 %v195, %v198
    %vm200 = vweird.f32 %v194
    %vm201 = vweird.f32 %v195
    %vm202 = vmor %vm200, %vm201
    %v203 = vsel %vm202, %v195, %v199
    %v204 = vand.u32 2147483647, %v194
    %vm205 = vcmp.eq.f32.partialorder %v204, 8.507059e+37
    %v206 = vand.u32 %v194, 2147483648
    %v207 = vor.u32 1.1754944e-38, %v206
    %v208 = vsel %vm205, %v207, %v203
    %v209 = vmul.f32 1.0, %v208
    %v210 = vtanh.pop %v190
    %v211 = vmul.f32 %v209, 0.0
    %213 = vrot.lane.b32.xlu0 %v210, 64
    %v214 = vpop.permute.xlu0 %213
    %v216 = vmul.f32 %v209, %v214
    %218 = vrot.lane.b32.xlu0 %v216, 32
    %v219 = vpop.permute.xlu0 %218
    %v221 = vadd.f32 %v211, %v219
    %v222 = vtanh.pop %v221
    %224 = vrot.lane.b32.xlu0 %v222, 64
    %v225 = vpop.permute.xlu0 %224
    %v227 = vmul.f32 %v209, %v225
    %s228 = scalar_lea.vmem [#allocation2], 8
    %v229 = vld [vmem:[%s228] sm:$0xff]
    %v230 = vadd.f32 %v229, %v144
    %v231 = vxor.u32 %v230, 2147483648
    %v232 = vmul.f32 %v231, 1.442695
    %v233 = vpow.pop %v232
    %v234 = vadd.f32 %v233, 1.0
    %v235 = vrcp.pop %v234
    %v236 = vmul.f32 %v234, %v235
    %v237 = vsub.f32 1.0, %v236
    %v238 = vmul.f32 %v235, %v237
    %v239 = vadd.f32 %v235, %v238
    %vm240 = vweird.f32 %v234
    %vm241 = vweird.f32 %v235
    %vm242 = vmor %vm240, %vm241
    %v243 = vsel %vm242, %v235, %v239
    %v244 = vand.u32 2147483647, %v234
    %vm245 = vcmp.eq.f32.partialorder %v244, 8.507059e+37
    %v246 = vand.u32 %v234, 2147483648
    %v247 = vor.u32 1.1754944e-38, %v246
    %v248 = vsel %vm245, %v247, %v243
    %v249 = vmul.f32 1.0, %v248
    %v250 = vtanh.pop %v230
    %v251 = vmul.f32 %v249, %v113
    %253 = vrot.lane.b32.xlu0 %v250, 64
    %v254 = vpop.permute.xlu0 %253
    %v256 = vmul.f32 %v249, %v254
    %258 = vrot.lane.b32.xlu0 %v256, 32
    %v259 = vpop.permute.xlu0 %258
    %v261 = vadd.f32 %v251, %v259
    %v262 = vtanh.pop %v261
    %264 = vrot.lane.b32.xlu0 %v262, 64
    %v265 = vpop.permute.xlu0 %264
    %v267 = vmul.f32 %v249, %v265
    %269 = vrot.lane.b32.xlu0 %v267, 32
    %v270 = vpop.permute.xlu0 %269
    %v271 = vsel %vm123, %v270, 0
    %273 = vmatpush.msra.mxu0 0.0
    %274 = vmatpush.msra.mxu0 0.0
    %275 = vmatpush.msra.mxu0 0.0
    %276 = vmatpush.msra.mxu0 0.0
    %277 = vmatpush.msra.mxu0 0.0
    %278 = vmatpush.msra.mxu0 0.0
    %279 = vmatpush.msra.mxu0 0.0
    %280 = vmatpush.msra.mxu0 0.0
    %281 = vmatpush.msra.mxu0 0.0
    %282 = vmatpush.msra.mxu0 0.0
    %283 = vmatpush.msra.mxu0 0.0
    %284 = vmatpush.msra.mxu0 0.0
    %285 = vmatpush.msra.mxu0 %v71
    %286 = vmatpush.msra.mxu0 %v69
    %287 = vmatpush.msra.mxu0 %v67
    %288 = vmatpush.msra.mxu0 %v65
    %289 = vmatmul.f32.gmra.mxu0 %v271
    %v290 = vpop.f32.mrf.mxu0
    %v291 = vadd.f32 0.0, %v290
    %292 = vdwg.mxu0
    %293 = vmatpush.msra.mxu0 0.0
    %294 = vmatpush.msra.mxu0 0.0
    %295 = vmatpush.msra.mxu0 0.0
    %296 = vmatpush.msra.mxu0 0.0
    %297 = vmatpush.msra.mxu0 0.0
    %298 = vmatpush.msra.mxu0 0.0
    %299 = vmatpush.msra.mxu0 0.0
    %300 = vmatpush.msra.mxu0 0.0
    %301 = vmatpush.msra.mxu0 0.0
    %302 = vmatpush.msra.mxu0 0.0
    %303 = vmatpush.msra.mxu0 0.0
    %304 = vmatpush.msra.mxu0 0.0
    %305 = vmatpush.msra.mxu0 %v72
    %306 = vmatpush.msra.mxu0 %v70
    %307 = vmatpush.msra.mxu0 %v68
    %308 = vmatpush.msra.mxu0 %v66
    %309 = vmatmul.f32.gmra.mxu0 %v271
    %v310 = vpop.f32.mrf.mxu0
    %v311 = vadd.f32 0.0, %v310
    %312 = vdwg.mxu0
    %314 = vrot.lane.b32.xlu0 %v227, 32
    %v315 = vpop.permute.xlu0 %314
    %v316 = vsel %vm123, %v315, 0
    %318 = vmatpush.msra.mxu0 0.0
    %319 = vmatpush.msra.mxu0 0.0
    %320 = vmatpush.msra.mxu0 0.0
    %321 = vmatpush.msra.mxu0 0.0
    %322 = vmatpush.msra.mxu0 0.0
    %323 = vmatpush.msra.mxu0 0.0
    %324 = vmatpush.msra.mxu0 0.0
    %325 = vmatpush.msra.mxu0 0.0
    %326 = vmatpush.msra.mxu0 0.0
    %327 = vmatpush.msra.mxu0 0.0
    %328 = vmatpush.msra.mxu0 0.0
    %329 = vmatpush.msra.mxu0 0.0
    %330 = vmatpush.msra.mxu0 %v76
    %331 = vmatpush.msra.mxu0 %v75
    %332 = vmatpush.msra.mxu0 %v74
    %333 = vmatpush.msra.mxu0 %v73
    %334 = vmatmul.f32.gmra.mxu0 %v316
    %v335 = vpop.f32.mrf.mxu0
    %v336 = vadd.f32 0.0, %v335
    %337 = vdwg.mxu0
    %v338 = vadd.f32 %v311, %v336
    %v339 = vadd.f32 %v338, %v79
    %v340 = vxor.u32 %v339, 2147483648
    %v341 = vmul.f32 %v340, 1.442695
    %v342 = vpow.pop %v341
    %v343 = vadd.f32 %v342, 1.0
    %v344 = vrcp.pop %v343
    %v345 = vmul.f32 %v343, %v344
    %v346 = vsub.f32 1.0, %v345
    %v347 = vmul.f32 %v344, %v346
    %v348 = vadd.f32 %v344, %v347
    %vm349 = vweird.f32 %v343
    %vm350 = vweird.f32 %v344
    %vm351 = vmor %vm349, %vm350
    %v352 = vsel %vm351, %v344, %v348
    %v353 = vand.u32 2147483647, %v343
    %vm354 = vcmp.eq.f32.partialorder %v353, 8.507059e+37
    %v355 = vand.u32 %v343, 2147483648
    %v356 = vor.u32 1.1754944e-38, %v355
    %v357 = vsel %vm354, %v356, %v352
    %v358 = vmul.f32 1.0, %v357
    %v359 = vtanh.pop %v339
    %v360 = vmul.f32 %v358, %v221
    %362 = vrot.lane.b32.xlu0 %v359, 64
    %v363 = vpop.permute.xlu0 %362
    %v365 = vmul.f32 %v358, %v363
    %367 = vrot.lane.b32.xlu0 %v365, 32
    %v368 = vpop.permute.xlu0 %367
    %v370 = vadd.f32 %v360, %v368
    %v371 = vtanh.pop %v370
    %373 = vrot.lane.b32.xlu0 %v371, 64
    %v374 = vpop.permute.xlu0 %373
    %v376 = vmul.f32 %v358, %v374
    %s377 = scalar_lea.vmem [#allocation2], 16
    %v378 = vld [vmem:[%s377] sm:$0xff]
    %v379 = vadd.f32 %v378, %v291
    %v380 = vxor.u32 %v379, 2147483648
    %v381 = vmul.f32 %v380, 1.442695
    %v382 = vpow.pop %v381
    %v383 = vadd.f32 %v382, 1.0
    %v384 = vrcp.pop %v383
    %v385 = vmul.f32 %v383, %v384
    %v386 = vsub.f32 1.0, %v385
    %v387 = vmul.f32 %v384, %v386
    %v388 = vadd.f32 %v384, %v387
    %vm389 = vweird.f32 %v383
    %vm390 = vweird.f32 %v384
    %vm391 = vmor %vm389, %vm390
    %v392 = vsel %vm391, %v384, %v388
    %v393 = vand.u32 2147483647, %v383
    %vm394 = vcmp.eq.f32.partialorder %v393, 8.507059e+37
    %v395 = vand.u32 %v383, 2147483648
    %v396 = vor.u32 1.1754944e-38, %v395
    %v397 = vsel %vm394, %v396, %v392
    %v398 = vmul.f32 1.0, %v397
    %v399 = vtanh.pop %v379
    %v400 = vmul.f32 %v398, %v261
    %402 = vrot.lane.b32.xlu0 %v399, 64
    %v403 = vpop.permute.xlu0 %402
    %v405 = vmul.f32 %v398, %v403
    %407 = vrot.lane.b32.xlu0 %v405, 32
    %v408 = vpop.permute.xlu0 %407
    %v410 = vadd.f32 %v400, %v408
    %v411 = vtanh.pop %v410
    %413 = vrot.lane.b32.xlu0 %v411, 64
    %v414 = vpop.permute.xlu0 %413
    %v416 = vmul.f32 %v398, %v414
    %418 = vrot.lane.b32.xlu0 %v416, 32
    %v419 = vpop.permute.xlu0 %418
    %v420 = vsel %vm123, %v419, 0
    %422 = vmatpush.msra.mxu0 0.0
    %423 = vmatpush.msra.mxu0 0.0
    %424 = vmatpush.msra.mxu0 0.0
    %425 = vmatpush.msra.mxu0 0.0
    %426 = vmatpush.msra.mxu0 0.0
    %427 = vmatpush.msra.mxu0 0.0
    %428 = vmatpush.msra.mxu0 0.0
    %429 = vmatpush.msra.mxu0 0.0
    %430 = vmatpush.msra.mxu0 0.0
    %431 = vmatpush.msra.mxu0 0.0
    %432 = vmatpush.msra.mxu0 0.0
    %433 = vmatpush.msra.mxu0 0.0
    %434 = vmatpush.msra.mxu0 %v71
    %435 = vmatpush.msra.mxu0 %v69
    %436 = vmatpush.msra.mxu0 %v67
    %437 = vmatpush.msra.mxu0 %v65
    %438 = vmatmul.f32.gmra.mxu0 %v420
    %v439 = vpop.f32.mrf.mxu0
    %v440 = vadd.f32 0.0, %v439
    %441 = vdwg.mxu0
    %442 = vmatpush.msra.mxu0 0.0
    %443 = vmatpush.msra.mxu0 0.0
    %444 = vmatpush.msra.mxu0 0.0
    %445 = vmatpush.msra.mxu0 0.0
    %446 = vmatpush.msra.mxu0 0.0
    %447 = vmatpush.msra.mxu0 0.0
    %448 = vmatpush.msra.mxu0 0.0
    %449 = vmatpush.msra.mxu0 0.0
    %450 = vmatpush.msra.mxu0 0.0
    %451 = vmatpush.msra.mxu0 0.0
    %452 = vmatpush.msra.mxu0 0.0
    %453 = vmatpush.msra.mxu0 0.0
    %454 = vmatpush.msra.mxu0 %v72
    %455 = vmatpush.msra.mxu0 %v70
    %456 = vmatpush.msra.mxu0 %v68
    %457 = vmatpush.msra.mxu0 %v66
    %458 = vmatmul.f32.gmra.mxu0 %v420
    %v459 = vpop.f32.mrf.mxu0
    %v460 = vadd.f32 0.0, %v459
    %461 = vdwg.mxu0
    %463 = vrot.lane.b32.xlu0 %v376, 32
    %v464 = vpop.permute.xlu0 %463
    %v465 = vsel %vm123, %v464, 0
    %467 = vmatpush.msra.mxu0 0.0
    %468 = vmatpush.msra.mxu0 0.0
    %469 = vmatpush.msra.mxu0 0.0
    %470 = vmatpush.msra.mxu0 0.0
    %471 = vmatpush.msra.mxu0 0.0
    %472 = vmatpush.msra.mxu0 0.0
    %473 = vmatpush.msra.mxu0 0.0
    %474 = vmatpush.msra.mxu0 0.0
    %475 = vmatpush.msra.mxu0 0.0
    %476 = vmatpush.msra.mxu0 0.0
    %477 = vmatpush.msra.mxu0 0.0
    %478 = vmatpush.msra.mxu0 0.0
    %479 = vmatpush.msra.mxu0 %v76
    %480 = vmatpush.msra.mxu0 %v75
    %481 = vmatpush.msra.mxu0 %v74
    %482 = vmatpush.msra.mxu0 %v73
    %483 = vmatmul.f32.gmra.mxu0 %v465
    %v484 = vpop.f32.mrf.mxu0
    %v485 = vadd.f32 0.0, %v484
    %486 = vdwg.mxu0
    %v487 = vadd.f32 %v460, %v485
    %v488 = vadd.f32 %v487, %v79
    %v489 = vxor.u32 %v488, 2147483648
    %v490 = vmul.f32 %v489, 1.442695
    %v491 = vpow.pop %v490
    %v492 = vadd.f32 %v491, 1.0
    %v493 = vrcp.pop %v492
    %v494 = vmul.f32 %v492, %v493
    %v495 = vsub.f32 1.0, %v494
    %v496 = vmul.f32 %v493, %v495
    %v497 = vadd.f32 %v493, %v496
    %vm498 = vweird.f32 %v492
    %vm499 = vweird.f32 %v493
    %vm500 = vmor %vm498, %vm499
    %v501 = vsel %vm500, %v493, %v497
    %v502 = vand.u32 2147483647, %v492
    %vm503 = vcmp.eq.f32.partialorder %v502, 8.507059e+37
    %v504 = vand.u32 %v492, 2147483648
    %v505 = vor.u32 1.1754944e-38, %v504
    %v506 = vsel %vm503, %v505, %v501
    %v507 = vmul.f32 1.0, %v506
    %v508 = vtanh.pop %v488
    %v509 = vmul.f32 %v507, %v370
    %511 = vrot.lane.b32.xlu0 %v508, 64
    %v512 = vpop.permute.xlu0 %511
    %v514 = vmul.f32 %v507, %v512
    %516 = vrot.lane.b32.xlu0 %v514, 32
    %v517 = vpop.permute.xlu0 %516
    %v519 = vadd.f32 %v509, %v517
    %v520 = vtanh.pop %v519
    %522 = vrot.lane.b32.xlu0 %v520, 64
    %v523 = vpop.permute.xlu0 %522
    %v525 = vmul.f32 %v507, %v523
    %s526 = scalar_lea.vmem [#allocation2], 24
    %v527 = vld [vmem:[%s526] sm:$0xff]
    %v528 = vadd.f32 %v527, %v440
    %v529 = vxor.u32 %v528, 2147483648
    %v530 = vmul.f32 %v529, 1.442695
    %v531 = vpow.pop %v530
    %v532 = vadd.f32 %v531, 1.0
    %v533 = vrcp.pop %v532
    %v534 = vmul.f32 %v532, %v533
    %v535 = vsub.f32 1.0, %v534
    %v536 = vmul.f32 %v533, %v535
    %v537 = vadd.f32 %v533, %v536
    %vm538 = vweird.f32 %v532
    %vm539 = vweird.f32 %v533
    %vm540 = vmor %vm538, %vm539
    %v541 = vsel %vm540, %v533, %v537
    %v542 = vand.u32 2147483647, %v532
    %vm543 = vcmp.eq.f32.partialorder %v542, 8.507059e+37
    %v544 = vand.u32 %v532, 2147483648
    %v545 = vor.u32 1.1754944e-38, %v544
    %v546 = vsel %vm543, %v545, %v541
    %v547 = vmul.f32 1.0, %v546
    %v548 = vtanh.pop %v528
    %v549 = vmul.f32 %v547, %v410
    %551 = vrot.lane.b32.xlu0 %v548, 64
    %v552 = vpop.permute.xlu0 %551
    %v554 = vmul.f32 %v547, %v552
    %556 = vrot.lane.b32.xlu0 %v554, 32
    %v557 = vpop.permute.xlu0 %556
    %v559 = vadd.f32 %v549, %v557
    %v560 = vtanh.pop %v559
    %562 = vrot.lane.b32.xlu0 %v560, 64
    %v563 = vpop.permute.xlu0 %562
    %v565 = vmul.f32 %v547, %v563
    %567 = vrot.lane.b32.xlu0 %v565, 32
    %v568 = vpop.permute.xlu0 %567
    %v569 = vsel %vm123, %v568, 0
    %571 = vmatpush.msra.mxu0 0.0
    %572 = vmatpush.msra.mxu0 0.0
    %573 = vmatpush.msra.mxu0 0.0
    %574 = vmatpush.msra.mxu0 0.0
    %575 = vmatpush.msra.mxu0 0.0
    %576 = vmatpush.msra.mxu0 0.0
    %577 = vmatpush.msra.mxu0 0.0
    %578 = vmatpush.msra.mxu0 0.0
    %579 = vmatpush.msra.mxu0 0.0
    %580 = vmatpush.msra.mxu0 0.0
    %581 = vmatpush.msra.mxu0 0.0
    %582 = vmatpush.msra.mxu0 0.0
    %583 = vmatpush.msra.mxu0 %v71
    %584 = vmatpush.msra.mxu0 %v69
    %585 = vmatpush.msra.mxu0 %v67
    %586 = vmatpush.msra.mxu0 %v65
    %587 = vmatmul.f32.gmra.mxu0 %v569
    %v588 = vpop.f32.mrf.mxu0
    %v589 = vadd.f32 0.0, %v588
    %590 = vdwg.mxu0
    %591 = vmatpush.msra.mxu0 0.0
    %592 = vmatpush.msra.mxu0 0.0
    %593 = vmatpush.msra.mxu0 0.0
    %594 = vmatpush.msra.mxu0 0.0
    %595 = vmatpush.msra.mxu0 0.0
    %596 = vmatpush.msra.mxu0 0.0
    %597 = vmatpush.msra.mxu0 0.0
    %598 = vmatpush.msra.mxu0 0.0
    %599 = vmatpush.msra.mxu0 0.0
    %600 = vmatpush.msra.mxu0 0.0
    %601 = vmatpush.msra.mxu0 0.0
    %602 = vmatpush.msra.mxu0 0.0
    %603 = vmatpush.msra.mxu0 %v72
    %604 = vmatpush.msra.mxu0 %v70
    %605 = vmatpush.msra.mxu0 %v68
    %606 = vmatpush.msra.mxu0 %v66
    %607 = vmatmul.f32.gmra.mxu0 %v569
    %v608 = vpop.f32.mrf.mxu0
    %v609 = vadd.f32 0.0, %v608
    %610 = vdwg.mxu0
    %612 = vrot.lane.b32.xlu0 %v525, 32
    %v613 = vpop.permute.xlu0 %612
    %v614 = vsel %vm123, %v613, 0
    %616 = vmatpush.msra.mxu0 0.0
    %617 = vmatpush.msra.mxu0 0.0
    %618 = vmatpush.msra.mxu0 0.0
    %619 = vmatpush.msra.mxu0 0.0
    %620 = vmatpush.msra.mxu0 0.0
    %621 = vmatpush.msra.mxu0 0.0
    %622 = vmatpush.msra.mxu0 0.0
    %623 = vmatpush.msra.mxu0 0.0
    %624 = vmatpush.msra.mxu0 0.0
    %625 = vmatpush.msra.mxu0 0.0
    %626 = vmatpush.msra.mxu0 0.0
    %627 = vmatpush.msra.mxu0 0.0
    %628 = vmatpush.msra.mxu0 %v76
    %629 = vmatpush.msra.mxu0 %v75
    %630 = vmatpush.msra.mxu0 %v74
    %631 = vmatpush.msra.mxu0 %v73
    %632 = vmatmul.f32.gmra.mxu0 %v614
    %v633 = vpop.f32.mrf.mxu0
    %v634 = vadd.f32 0.0, %v633
    %635 = vdwg.mxu0
    %v636 = vadd.f32 %v609, %v634
    %v637 = vadd.f32 %v636, %v79
    %v638 = vxor.u32 %v637, 2147483648
    %v639 = vmul.f32 %v638, 1.442695
    %v640 = vpow.pop %v639
    %v641 = vadd.f32 %v640, 1.0
    %v642 = vrcp.pop %v641
    %v643 = vmul.f32 %v641, %v642
    %v644 = vsub.f32 1.0, %v643
    %v645 = vmul.f32 %v642, %v644
    %v646 = vadd.f32 %v642, %v645
    %vm647 = vweird.f32 %v641
    %vm648 = vweird.f32 %v642
    %vm649 = vmor %vm647, %vm648
    %v650 = vsel %vm649, %v642, %v646
    %v651 = vand.u32 2147483647, %v641
    %vm652 = vcmp.eq.f32.partialorder %v651, 8.507059e+37
    %v653 = vand.u32 %v641, 2147483648
    %v654 = vor.u32 1.1754944e-38, %v653
    %v655 = vsel %vm652, %v654, %v650
    %v656 = vmul.f32 1.0, %v655
    %v657 = vtanh.pop %v637
    %v658 = vmul.f32 %v656, %v519
    %660 = vrot.lane.b32.xlu0 %v657, 64
    %v661 = vpop.permute.xlu0 %660
    %v663 = vmul.f32 %v656, %v661
    %665 = vrot.lane.b32.xlu0 %v663, 32
    %v666 = vpop.permute.xlu0 %665
    %v668 = vadd.f32 %v658, %v666
    %v669 = vtanh.pop %v668
    %671 = vrot.lane.b32.xlu0 %v669, 64
    %v672 = vpop.permute.xlu0 %671
    %v674 = vmul.f32 %v656, %v672
    %s675 = scalar_lea.vmem [#allocation2], 32
    %v676 = vld [vmem:[%s675] sm:$0xff]
    %v677 = vadd.f32 %v676, %v589
    %v678 = vxor.u32 %v677, 2147483648
    %v679 = vmul.f32 %v678, 1.442695
    %v680 = vpow.pop %v679
    %v681 = vadd.f32 %v680, 1.0
    %v682 = vrcp.pop %v681
    %v683 = vmul.f32 %v681, %v682
    %v684 = vsub.f32 1.0, %v683
    %v685 = vmul.f32 %v682, %v684
    %v686 = vadd.f32 %v682, %v685
    %vm687 = vweird.f32 %v681
    %vm688 = vweird.f32 %v682
    %vm689 = vmor %vm687, %vm688
    %v690 = vsel %vm689, %v682, %v686
    %v691 = vand.u32 2147483647, %v681
    %vm692 = vcmp.eq.f32.partialorder %v691, 8.507059e+37
    %v693 = vand.u32 %v681, 2147483648
    %v694 = vor.u32 1.1754944e-38, %v693
    %v695 = vsel %vm692, %v694, %v690
    %v696 = vmul.f32 1.0, %v695
    %v697 = vtanh.pop %v677
    %v698 = vmul.f32 %v696, %v559
    %700 = vrot.lane.b32.xlu0 %v697, 64
    %v701 = vpop.permute.xlu0 %700
    %v703 = vmul.f32 %v696, %v701
    %705 = vrot.lane.b32.xlu0 %v703, 32
    %v706 = vpop.permute.xlu0 %705
    %v708 = vadd.f32 %v698, %v706
    %v709 = vtanh.pop %v708
    %711 = vrot.lane.b32.xlu0 %v709, 64
    %v712 = vpop.permute.xlu0 %711
    %v714 = vmul.f32 %v696, %v712
    %716 = vrot.lane.b32.xlu0 %v714, 32
    %v717 = vpop.permute.xlu0 %716
    %v718 = vsel %vm123, %v717, 0
    %720 = vmatpush.msra.mxu0 0.0
    %721 = vmatpush.msra.mxu0 0.0
    %722 = vmatpush.msra.mxu0 0.0
    %723 = vmatpush.msra.mxu0 0.0
    %724 = vmatpush.msra.mxu0 0.0
    %725 = vmatpush.msra.mxu0 0.0
    %726 = vmatpush.msra.mxu0 0.0
    %727 = vmatpush.msra.mxu0 0.0
    %728 = vmatpush.msra.mxu0 0.0
    %729 = vmatpush.msra.mxu0 0.0
    %730 = vmatpush.msra.mxu0 0.0
    %731 = vmatpush.msra.mxu0 0.0
    %732 = vmatpush.msra.mxu0 %v71
    %733 = vmatpush.msra.mxu0 %v69
    %734 = vmatpush.msra.mxu0 %v67
    %735 = vmatpush.msra.mxu0 %v65
    %736 = vmatmul.f32.gmra.mxu0 %v718
    %v737 = vpop.f32.mrf.mxu0
    %v738 = vadd.f32 0.0, %v737
    %739 = vdwg.mxu0
    %740 = vmatpush.msra.mxu0 0.0
    %741 = vmatpush.msra.mxu0 0.0
    %742 = vmatpush.msra.mxu0 0.0
    %743 = vmatpush.msra.mxu0 0.0
    %744 = vmatpush.msra.mxu0 0.0
    %745 = vmatpush.msra.mxu0 0.0
    %746 = vmatpush.msra.mxu0 0.0
    %747 = vmatpush.msra.mxu0 0.0
    %748 = vmatpush.msra.mxu0 0.0
    %749 = vmatpush.msra.mxu0 0.0
    %750 = vmatpush.msra.mxu0 0.0
    %751 = vmatpush.msra.mxu0 0.0
    %752 = vmatpush.msra.mxu0 %v72
    %753 = vmatpush.msra.mxu0 %v70
    %754 = vmatpush.msra.mxu0 %v68
    %755 = vmatpush.msra.mxu0 %v66
    %756 = vmatmul.f32.gmra.mxu0 %v718
    %v757 = vpop.f32.mrf.mxu0
    %v758 = vadd.f32 0.0, %v757
    %759 = vdwg.mxu0
    %761 = vrot.lane.b32.xlu0 %v674, 32
    %v762 = vpop.permute.xlu0 %761
    %v763 = vsel %vm123, %v762, 0
    %765 = vmatpush.msra.mxu0 0.0
    %766 = vmatpush.msra.mxu0 0.0
    %767 = vmatpush.msra.mxu0 0.0
    %768 = vmatpush.msra.mxu0 0.0
    %769 = vmatpush.msra.mxu0 0.0
    %770 = vmatpush.msra.mxu0 0.0
    %771 = vmatpush.msra.mxu0 0.0
    %772 = vmatpush.msra.mxu0 0.0
    %773 = vmatpush.msra.mxu0 0.0
    %774 = vmatpush.msra.mxu0 0.0
    %775 = vmatpush.msra.mxu0 0.0
    %776 = vmatpush.msra.mxu0 0.0
    %777 = vmatpush.msra.mxu0 %v76
    %778 = vmatpush.msra.mxu0 %v75
    %779 = vmatpush.msra.mxu0 %v74
    %780 = vmatpush.msra.mxu0 %v73
    %781 = vmatmul.f32.gmra.mxu0 %v763
    %v782 = vpop.f32.mrf.mxu0
    %v783 = vadd.f32 0.0, %v782
    %784 = vdwg.mxu0
    %v785 = vadd.f32 %v758, %v783
    %v786 = vadd.f32 %v785, %v79
    %v787 = vxor.u32 %v786, 2147483648
    %v788 = vmul.f32 %v787, 1.442695
    %v789 = vpow.pop %v788
    %v790 = vadd.f32 %v789, 1.0
    %v791 = vrcp.pop %v790
    %v792 = vmul.f32 %v790, %v791
    %v793 = vsub.f32 1.0, %v792
    %v794 = vmul.f32 %v791, %v793
    %v795 = vadd.f32 %v791, %v794
    %vm796 = vweird.f32 %v790
    %vm797 = vweird.f32 %v791
    %vm798 = vmor %vm796, %vm797
    %v799 = vsel %vm798, %v791, %v795
    %v800 = vand.u32 2147483647, %v790
    %vm801 = vcmp.eq.f32.partialorder %v800, 8.507059e+37
    %v802 = vand.u32 %v790, 2147483648
    %v803 = vor.u32 1.1754944e-38, %v802
    %v804 = vsel %vm801, %v803, %v799
    %v805 = vmul.f32 1.0, %v804
    %v806 = vtanh.pop %v786
    %v807 = vmul.f32 %v805, %v668
    %809 = vrot.lane.b32.xlu0 %v806, 64
    %v810 = vpop.permute.xlu0 %809
    %v812 = vmul.f32 %v805, %v810
    %814 = vrot.lane.b32.xlu0 %v812, 32
    %v815 = vpop.permute.xlu0 %814
    %v817 = vadd.f32 %v807, %v815
    %v818 = vtanh.pop %v817
    %820 = vrot.lane.b32.xlu0 %v818, 64
    %v821 = vpop.permute.xlu0 %820
    %v823 = vmul.f32 %v805, %v821
    %s824 = scalar_lea.vmem [#allocation2], 40
    %v825 = vld [vmem:[%s824] sm:$0xff]
    %v826 = vadd.f32 %v825, %v738
    %v827 = vxor.u32 %v826, 2147483648
    %v828 = vmul.f32 %v827, 1.442695
    %v829 = vpow.pop %v828
    %v830 = vadd.f32 %v829, 1.0
    %v831 = vrcp.pop %v830
    %v832 = vmul.f32 %v830, %v831
    %v833 = vsub.f32 1.0, %v832
    %v834 = vmul.f32 %v831, %v833
    %v835 = vadd.f32 %v831, %v834
    %vm836 = vweird.f32 %v830
    %vm837 = vweird.f32 %v831
    %vm838 = vmor %vm836, %vm837
    %v839 = vsel %vm838, %v831, %v835
    %v840 = vand.u32 2147483647, %v830
    %vm841 = vcmp.eq.f32.partialorder %v840, 8.507059e+37
    %v842 = vand.u32 %v830, 2147483648
    %v843 = vor.u32 1.1754944e-38, %v842
    %v844 = vsel %vm841, %v843, %v839
    %v845 = vmul.f32 1.0, %v844
    %v846 = vtanh.pop %v826
    %v847 = vmul.f32 %v845, %v708
    %849 = vrot.lane.b32.xlu0 %v846, 64
    %v850 = vpop.permute.xlu0 %849
    %v852 = vmul.f32 %v845, %v850
    %854 = vrot.lane.b32.xlu0 %v852, 32
    %v855 = vpop.permute.xlu0 %854
    %v857 = vadd.f32 %v847, %v855
    %v858 = vtanh.pop %v857
    %860 = vrot.lane.b32.xlu0 %v858, 64
    %v861 = vpop.permute.xlu0 %860
    %v863 = vmul.f32 %v845, %v861
    %865 = vrot.lane.b32.xlu0 %v863, 32
    %v866 = vpop.permute.xlu0 %865
    %v867 = vsel %vm123, %v866, 0
    %869 = vmatpush.msra.mxu0 0.0
    %870 = vmatpush.msra.mxu0 0.0
    %871 = vmatpush.msra.mxu0 0.0
    %872 = vmatpush.msra.mxu0 0.0
    %873 = vmatpush.msra.mxu0 0.0
    %874 = vmatpush.msra.mxu0 0.0
    %875 = vmatpush.msra.mxu0 0.0
    %876 = vmatpush.msra.mxu0 0.0
    %877 = vmatpush.msra.mxu0 0.0
    %878 = vmatpush.msra.mxu0 0.0
    %879 = vmatpush.msra.mxu0 0.0
    %880 = vmatpush.msra.mxu0 0.0
    %881 = vmatpush.msra.mxu0 %v71
    %882 = vmatpush.msra.mxu0 %v69
    %883 = vmatpush.msra.mxu0 %v67
    %884 = vmatpush.msra.mxu0 %v65
    %885 = vmatmul.f32.gmra.mxu0 %v867
    %v886 = vpop.f32.mrf.mxu0
    %v887 = vadd.f32 0.0, %v886
    %888 = vdwg.mxu0
    %889 = vmatpush.msra.mxu0 0.0
    %890 = vmatpush.msra.mxu0 0.0
    %891 = vmatpush.msra.mxu0 0.0
    %892 = vmatpush.msra.mxu0 0.0
    %893 = vmatpush.msra.mxu0 0.0
    %894 = vmatpush.msra.mxu0 0.0
    %895 = vmatpush.msra.mxu0 0.0
    %896 = vmatpush.msra.mxu0 0.0
    %897 = vmatpush.msra.mxu0 0.0
    %898 = vmatpush.msra.mxu0 0.0
    %899 = vmatpush.msra.mxu0 0.0
    %900 = vmatpush.msra.mxu0 0.0
    %901 = vmatpush.msra.mxu0 %v72
    %902 = vmatpush.msra.mxu0 %v70
    %903 = vmatpush.msra.mxu0 %v68
    %904 = vmatpush.msra.mxu0 %v66
    %905 = vmatmul.f32.gmra.mxu0 %v867
    %v906 = vpop.f32.mrf.mxu0
    %v907 = vadd.f32 0.0, %v906
    %908 = vdwg.mxu0
    %910 = vrot.lane.b32.xlu0 %v823, 32
    %v911 = vpop.permute.xlu0 %910
    %v912 = vsel %vm123, %v911, 0
    %914 = vmatpush.msra.mxu0 0.0
    %915 = vmatpush.msra.mxu0 0.0
    %916 = vmatpush.msra.mxu0 0.0
    %917 = vmatpush.msra.mxu0 0.0
    %918 = vmatpush.msra.mxu0 0.0
    %919 = vmatpush.msra.mxu0 0.0
    %920 = vmatpush.msra.mxu0 0.0
    %921 = vmatpush.msra.mxu0 0.0
    %922 = vmatpush.msra.mxu0 0.0
    %923 = vmatpush.msra.mxu0 0.0
    %924 = vmatpush.msra.mxu0 0.0
    %925 = vmatpush.msra.mxu0 0.0
    %926 = vmatpush.msra.mxu0 %v76
    %927 = vmatpush.msra.mxu0 %v75
    %928 = vmatpush.msra.mxu0 %v74
    %929 = vmatpush.msra.mxu0 %v73
    %930 = vmatmul.f32.gmra.mxu0 %v912
    %v931 = vpop.f32.mrf.mxu0
    %v932 = vadd.f32 0.0, %v931
    %933 = vdwg.mxu0
    %v934 = vadd.f32 %v907, %v932
    %v935 = vadd.f32 %v934, %v79
    %v936 = vxor.u32 %v935, 2147483648
    %v937 = vmul.f32 %v936, 1.442695
    %v938 = vpow.pop %v937
    %v939 = vadd.f32 %v938, 1.0
    %v940 = vrcp.pop %v939
    %v941 = vmul.f32 %v939, %v940
    %v942 = vsub.f32 1.0, %v941
    %v943 = vmul.f32 %v940, %v942
    %v944 = vadd.f32 %v940, %v943
    %vm945 = vweird.f32 %v939
    %vm946 = vweird.f32 %v940
    %vm947 = vmor %vm945, %vm946
    %v948 = vsel %vm947, %v940, %v944
    %v949 = vand.u32 2147483647, %v939
    %vm950 = vcmp.eq.f32.partialorder %v949, 8.507059e+37
    %v951 = vand.u32 %v939, 2147483648
    %v952 = vor.u32 1.1754944e-38, %v951
    %v953 = vsel %vm950, %v952, %v948
    %v954 = vmul.f32 1.0, %v953
    %v955 = vtanh.pop %v935
    %v956 = vmul.f32 %v954, %v817
    %958 = vrot.lane.b32.xlu0 %v955, 64
    %v959 = vpop.permute.xlu0 %958
    %v961 = vmul.f32 %v954, %v959
    %963 = vrot.lane.b32.xlu0 %v961, 32
    %v964 = vpop.permute.xlu0 %963
    %v966 = vadd.f32 %v956, %v964
    %v967 = vtanh.pop %v966
    %969 = vrot.lane.b32.xlu0 %v967, 64
    %v970 = vpop.permute.xlu0 %969
    %v972 = vmul.f32 %v954, %v970
    %s973 = scalar_lea.vmem [#allocation2], 48
    %v974 = vld [vmem:[%s973] sm:$0xff]
    %v975 = vadd.f32 %v974, %v887
    %v976 = vxor.u32 %v975, 2147483648
    %v977 = vmul.f32 %v976, 1.442695
    %v978 = vpow.pop %v977
    %v979 = vadd.f32 %v978, 1.0
    %v980 = vrcp.pop %v979
    %v981 = vmul.f32 %v979, %v980
    %v982 = vsub.f32 1.0, %v981
    %v983 = vmul.f32 %v980, %v982
    %v984 = vadd.f32 %v980, %v983
    %vm985 = vweird.f32 %v979
    %vm986 = vweird.f32 %v980
    %vm987 = vmor %vm985, %vm986
    %v988 = vsel %vm987, %v980, %v984
    %v989 = vand.u32 2147483647, %v979
    %vm990 = vcmp.eq.f32.partialorder %v989, 8.507059e+37
    %v991 = vand.u32 %v979, 2147483648
    %v992 = vor.u32 1.1754944e-38, %v991
    %v993 = vsel %vm990, %v992, %v988
    %v994 = vmul.f32 1.0, %v993
    %v995 = vtanh.pop %v975
    %v996 = vmul.f32 %v994, %v857
    %998 = vrot.lane.b32.xlu0 %v995, 64
    %v999 = vpop.permute.xlu0 %998
    %v1001 = vmul.f32 %v994, %v999
    %1003 = vrot.lane.b32.xlu0 %v1001, 32
    %v1004 = vpop.permute.xlu0 %1003
    %v1006 = vadd.f32 %v996, %v1004
    %v1007 = vtanh.pop %v1006
    %1009 = vrot.lane.b32.xlu0 %v1007, 64
    %v1010 = vpop.permute.xlu0 %1009
    %v1012 = vmul.f32 %v994, %v1010
    %1014 = vrot.lane.b32.xlu0 %v1012, 32
    %v1015 = vpop.permute.xlu0 %1014
    %v1016 = vsel %vm123, %v1015, 0
    %1018 = vmatpush.msra.mxu0 0.0
    %1019 = vmatpush.msra.mxu0 0.0
    %1020 = vmatpush.msra.mxu0 0.0
    %1021 = vmatpush.msra.mxu0 0.0
    %1022 = vmatpush.msra.mxu0 0.0
    %1023 = vmatpush.msra.mxu0 0.0
    %1024 = vmatpush.msra.mxu0 0.0
    %1025 = vmatpush.msra.mxu0 0.0
    %1026 = vmatpush.msra.mxu0 0.0
    %1027 = vmatpush.msra.mxu0 0.0
    %1028 = vmatpush.msra.mxu0 0.0
    %1029 = vmatpush.msra.mxu0 0.0
    %1030 = vmatpush.msra.mxu0 %v71
    %1031 = vmatpush.msra.mxu0 %v69
    %1032 = vmatpush.msra.mxu0 %v67
    %1033 = vmatpush.msra.mxu0 %v65
    %1034 = vmatmul.f32.gmra.mxu0 %v1016
    %v1035 = vpop.f32.mrf.mxu0
    %v1036 = vadd.f32 0.0, %v1035
    %1037 = vdwg.mxu0
    %1038 = vmatpush.msra.mxu0 0.0
    %1039 = vmatpush.msra.mxu0 0.0
    %1040 = vmatpush.msra.mxu0 0.0
    %1041 = vmatpush.msra.mxu0 0.0
    %1042 = vmatpush.msra.mxu0 0.0
    %1043 = vmatpush.msra.mxu0 0.0
    %1044 = vmatpush.msra.mxu0 0.0
    %1045 = vmatpush.msra.mxu0 0.0
    %1046 = vmatpush.msra.mxu0 0.0
    %1047 = vmatpush.msra.mxu0 0.0
    %1048 = vmatpush.msra.mxu0 0.0
    %1049 = vmatpush.msra.mxu0 0.0
    %1050 = vmatpush.msra.mxu0 %v72
    %1051 = vmatpush.msra.mxu0 %v70
    %1052 = vmatpush.msra.mxu0 %v68
    %1053 = vmatpush.msra.mxu0 %v66
    %1054 = vmatmul.f32.gmra.mxu0 %v1016
    %v1055 = vpop.f32.mrf.mxu0
    %v1056 = vadd.f32 0.0, %v1055
    %1057 = vdwg.mxu0
    %1059 = vrot.lane.b32.xlu0 %v972, 32
    %v1060 = vpop.permute.xlu0 %1059
    %v1061 = vsel %vm123, %v1060, 0
    %1063 = vmatpush.msra.mxu0 0.0
    %1064 = vmatpush.msra.mxu0 0.0
    %1065 = vmatpush.msra.mxu0 0.0
    %1066 = vmatpush.msra.mxu0 0.0
    %1067 = vmatpush.msra.mxu0 0.0
    %1068 = vmatpush.msra.mxu0 0.0
    %1069 = vmatpush.msra.mxu0 0.0
    %1070 = vmatpush.msra.mxu0 0.0
    %1071 = vmatpush.msra.mxu0 0.0
    %1072 = vmatpush.msra.mxu0 0.0
    %1073 = vmatpush.msra.mxu0 0.0
    %1074 = vmatpush.msra.mxu0 0.0
    %1075 = vmatpush.msra.mxu0 %v76
    %1076 = vmatpush.msra.mxu0 %v75
    %1077 = vmatpush.msra.mxu0 %v74
    %1078 = vmatpush.msra.mxu0 %v73
    %1079 = vmatmul.f32.gmra.mxu0 %v1061
    %v1080 = vpop.f32.mrf.mxu0
    %v1081 = vadd.f32 0.0, %v1080
    %1082 = vdwg.mxu0
    %v1083 = vadd.f32 %v1056, %v1081
    %v1084 = vadd.f32 %v1083, %v79
    %v1085 = vxor.u32 %v1084, 2147483648
    %v1086 = vmul.f32 %v1085, 1.442695
    %v1087 = vpow.pop %v1086
    %v1088 = vadd.f32 %v1087, 1.0
    %v1089 = vrcp.pop %v1088
    %v1090 = vmul.f32 %v1088, %v1089
    %v1091 = vsub.f32 1.0, %v1090
    %v1092 = vmul.f32 %v1089, %v1091
    %v1093 = vadd.f32 %v1089, %v1092
    %vm1094 = vweird.f32 %v1088
    %vm1095 = vweird.f32 %v1089
    %vm1096 = vmor %vm1094, %vm1095
    %v1097 = vsel %vm1096, %v1089, %v1093
    %v1098 = vand.u32 2147483647, %v1088
    %vm1099 = vcmp.eq.f32.partialorder %v1098, 8.507059e+37
    %v1100 = vand.u32 %v1088, 2147483648
    %v1101 = vor.u32 1.1754944e-38, %v1100
    %v1102 = vsel %vm1099, %v1101, %v1097
    %v1103 = vmul.f32 1.0, %v1102
    %v1104 = vtanh.pop %v1084
    %v1105 = vmul.f32 %v1103, %v966
    %1107 = vrot.lane.b32.xlu0 %v1104, 64
    %v1108 = vpop.permute.xlu0 %1107
    %v1110 = vmul.f32 %v1103, %v1108
    %1112 = vrot.lane.b32.xlu0 %v1110, 32
    %v1113 = vpop.permute.xlu0 %1112
    %v1115 = vadd.f32 %v1105, %v1113
    %v1116 = vtanh.pop %v1115
    %1118 = vrot.lane.b32.xlu0 %v1116, 64
    %v1119 = vpop.permute.xlu0 %1118
    %v1121 = vmul.f32 %v1103, %v1119
    %s1122 = scalar_lea.vmem [#allocation2], 56
    %v1123 = vld [vmem:[%s1122] sm:$0xff]
    %v1124 = vadd.f32 %v1123, %v1036
    %v1125 = vxor.u32 %v1124, 2147483648
    %v1126 = vmul.f32 %v1125, 1.442695
    %v1127 = vpow.pop %v1126
    %v1128 = vadd.f32 %v1127, 1.0
    %v1129 = vrcp.pop %v1128
    %v1130 = vmul.f32 %v1128, %v1129
    %v1131 = vsub.f32 1.0, %v1130
    %v1132 = vmul.f32 %v1129, %v1131
    %v1133 = vadd.f32 %v1129, %v1132
    %vm1134 = vweird.f32 %v1128
    %vm1135 = vweird.f32 %v1129
    %vm1136 = vmor %vm1134, %vm1135
    %v1137 = vsel %vm1136, %v1129, %v1133
    %v1138 = vand.u32 2147483647, %v1128
    %vm1139 = vcmp.eq.f32.partialorder %v1138, 8.507059e+37
    %v1140 = vand.u32 %v1128, 2147483648
    %v1141 = vor.u32 1.1754944e-38, %v1140
    %v1142 = vsel %vm1139, %v1141, %v1137
    %v1143 = vmul.f32 1.0, %v1142
    %v1144 = vtanh.pop %v1124
    %v1145 = vmul.f32 %v1143, %v1006
    %1147 = vrot.lane.b32.xlu0 %v1144, 64
    %v1148 = vpop.permute.xlu0 %1147
    %v1150 = vmul.f32 %v1143, %v1148
    %1152 = vrot.lane.b32.xlu0 %v1150, 32
    %v1153 = vpop.permute.xlu0 %1152
    %v1155 = vadd.f32 %v1145, %v1153
    %v1156 = vtanh.pop %v1155
    %1158 = vrot.lane.b32.xlu0 %v1156, 64
    %v1159 = vpop.permute.xlu0 %1158
    %v1161 = vmul.f32 %v1143, %v1159
    %1163 = vrot.lane.b32.xlu0 %v1161, 32
    %v1164 = vpop.permute.xlu0 %1163
    %v1165 = vsel %vm123, %v1164, 0
    %1167 = vmatpush.msra.mxu0 0.0
    %1168 = vmatpush.msra.mxu0 0.0
    %1169 = vmatpush.msra.mxu0 0.0
    %1170 = vmatpush.msra.mxu0 0.0
    %1171 = vmatpush.msra.mxu0 0.0
    %1172 = vmatpush.msra.mxu0 0.0
    %1173 = vmatpush.msra.mxu0 0.0
    %1174 = vmatpush.msra.mxu0 0.0
    %1175 = vmatpush.msra.mxu0 0.0
    %1176 = vmatpush.msra.mxu0 0.0
    %1177 = vmatpush.msra.mxu0 0.0
    %1178 = vmatpush.msra.mxu0 0.0
    %1179 = vmatpush.msra.mxu0 %v72
    %1180 = vmatpush.msra.mxu0 %v70
    %1181 = vmatpush.msra.mxu0 %v68
    %1182 = vmatpush.msra.mxu0 %v66
    %1183 = vmatmul.f32.gmra.mxu0 %v1165
    %v1184 = vpop.f32.mrf.mxu0
    %v1185 = vadd.f32 0.0, %v1184
    %1186 = vdwg.mxu0
    %1188 = vrot.lane.b32.xlu0 %v1121, 32
    %v1189 = vpop.permute.xlu0 %1188
    %v1190 = vsel %vm123, %v1189, 0
    %1192 = vmatpush.msra.mxu0 0.0
    %1193 = vmatpush.msra.mxu0 0.0
    %1194 = vmatpush.msra.mxu0 0.0
    %1195 = vmatpush.msra.mxu0 0.0
    %1196 = vmatpush.msra.mxu0 0.0
    %1197 = vmatpush.msra.mxu0 0.0
    %1198 = vmatpush.msra.mxu0 0.0
    %1199 = vmatpush.msra.mxu0 0.0
    %1200 = vmatpush.msra.mxu0 0.0
    %1201 = vmatpush.msra.mxu0 0.0
    %1202 = vmatpush.msra.mxu0 0.0
    %1203 = vmatpush.msra.mxu0 0.0
    %1204 = vmatpush.msra.mxu0 %v76
    %1205 = vmatpush.msra.mxu0 %v75
    %1206 = vmatpush.msra.mxu0 %v74
    %1207 = vmatpush.msra.mxu0 %v73
    %1208 = vmatmul.f32.gmra.mxu0 %v1190
    %v1209 = vpop.f32.mrf.mxu0
    %v1210 = vadd.f32 0.0, %v1209
    %1211 = vdwg.mxu0
    %v1212 = vadd.f32 %v1185, %v1210
    %v1213 = vadd.f32 %v1212, %v79
    %v1214 = vxor.u32 %v1213, 2147483648
    %v1215 = vmul.f32 %v1214, 1.442695
    %v1216 = vpow.pop %v1215
    %v1217 = vadd.f32 %v1216, 1.0
    %v1218 = vrcp.pop %v1217
    %v1219 = vmul.f32 %v1217, %v1218
    %v1220 = vsub.f32 1.0, %v1219
    %v1221 = vmul.f32 %v1218, %v1220
    %v1222 = vadd.f32 %v1218, %v1221
    %vm1223 = vweird.f32 %v1217
    %vm1224 = vweird.f32 %v1218
    %vm1225 = vmor %vm1223, %vm1224
    %v1226 = vsel %vm1225, %v1218, %v1222
    %v1227 = vand.u32 2147483647, %v1217
    %vm1228 = vcmp.eq.f32.partialorder %v1227, 8.507059e+37
    %v1229 = vand.u32 %v1217, 2147483648
    %v1230 = vor.u32 1.1754944e-38, %v1229
    %v1231 = vsel %vm1228, %v1230, %v1226
    %v1232 = vmul.f32 1.0, %v1231
    %v1233 = vtanh.pop %v1213
    %v1234 = vmul.f32 %v1232, %v1115
    %1236 = vrot.lane.b32.xlu0 %v1233, 64
    %v1237 = vpop.permute.xlu0 %1236
    %v1239 = vmul.f32 %v1232, %v1237
    %1241 = vrot.lane.b32.xlu0 %v1239, 32
    %v1242 = vpop.permute.xlu0 %1241
    %v1244 = vadd.f32 %v1234, %v1242
    %v1245 = vtanh.pop %v1244
    %1247 = vrot.lane.b32.xlu0 %v1245, 64
    %v1248 = vpop.permute.xlu0 %1247
    %v1250 = vmul.f32 %v1232, %v1248
    %1252 = vrot.lane.b32.xlu0 %v1250, 32
    %v1253 = vpop.permute.xlu0 %1252
    %1255 = vst.msk [vmem:[#allocation8] sm:$0xff] %vm123, %v1253
    // Predicated region
    $region30: #{tpu_custom_call.1} parent=1 // pred_check
      _
    $region31: #{tpu_custom_call.1} parent=1 // pred_check_branch
      %1257 = sbr.rel (0) target = $region33
    $region32: #{tpu_custom_call.1} parent=1 // pred_region
      %1259 = vsyncadd [#allocation4], 0
      %s1261 = sshll.u32 [#allocation8], 4
      %s1262 = int_to_ptr.vmem [resolvable:$true] %s1261
      %s1263 = sshll.u32 %s4, 4
      %s1264 = int_to_ptr.hbm [resolvable:$true] %s1263
      %1266 = dma.vmem_to_hbm [thread:$0]  %s1262, 128, %s1264, [#allocation4]
    $region33: #{tpu_custom_call.1} parent=1 // pred_fallthru
      _
    // Predicated region
    $region34: #{tpu_custom_call.1} parent=1 // pred_check
      _
    $region35: #{tpu_custom_call.1} parent=1 // pred_check_branch
      %1268 = sbr.rel (0) target = $region37
    $region36: #{tpu_custom_call.1} parent=1 // pred_region
      %1270 = dma.done [#allocation4], 128
    $region37: #{tpu_custom_call.1} parent=1 // pred_fallthru
      _
    %1271 = vsyncpa [#allocation3], 1
    %1272 = vsyncpa [#allocation6], 1
    %1273 = vsyncpa [#allocation4], 1

</llo_original>
